<compile_context>
chip_gen: v7x
topology: tpu7x:2x2x1
jax: 0.10.0
libtpu: 0.0.40
codegen_flags: <defaults>
</compile_context>

<pallas_src>
import math

import jax
import jax.numpy as jnp
import numpy as np
from jax.experimental import pallas as pl
from jax.experimental.pallas import tpu as pltpu


def _make_kernel(N, Cin, H, W, init_c, new_c, oup, ratio):
    KH = KW = 3
    NW = N * W
    L1 = init_c * NW                     # lanes of the primary-conv planes
    L2 = oup * NW                        # lanes of the ghost / output planes
    kept = min(new_c, oup - init_c)      # cheap_operation channels kept by out[:, :oup]
    R0, C0 = 8, 128                      # tile-aligned interior origin inside scratch

    def kernel(xp_ref,
               wdw_ref, bndw_s_ref, bndw_b_ref,
               wc2_ref, bn2_s_ref, bn2_shift_ref,
               w1_ref, bn1_s_ref, bn1_b_ref,
               wadd_ref, bnadd_s_ref, bnadd_b_ref,
               o_ref, buf):
        # Zero the halo (whole scratch) once -- single invocation, never re-zeroed.
        buf[...] = jnp.zeros(buf.shape, jnp.float32)

        def edge_masks(L):
            col = jax.lax.broadcasted_iota(jnp.int32, (H, L), 1) % W
            return col == 0, col == (W - 1)

        def window(L, dh, dw, lo, hi):
            # Value of the packed plane shifted by (dh, dw); interior lives at (R0, C0).
            v = buf[R0 + dh:R0 + dh + H, C0 + dw:C0 + dw + L]
            if dw == 1:
                return jnp.where(hi, 0.0, v)     # right edge of each W-segment -> zero pad
            if dw == -1:
                return jnp.where(lo, 0.0, v)     # left edge of each W-segment -> zero pad
            return v

        xp = xp_ref[...]                 # (H, Cin*N*W), lanes ordered (c, n, w)

        # ---- GhostModule.primary_conv[0]: 1x1 conv -> BN1 ----
        for co in range(init_c):
            acc = jnp.zeros((H, NW), jnp.float32)
            for ci in range(Cin):
                acc = acc + w1_ref[co, ci] * xp[:, ci * NW:(ci + 1) * NW]
            y = acc * bn1_s_ref[co] + bn1_b_ref[co]
            buf[R0:R0 + H, C0 + co * NW:C0 + (co + 1) * NW] = y

        lo1, hi1 = edge_masks(L1)

        # ---- primary_conv[2]: depthwise 3x3 conv -> BN (-> Identity) ----
        x1 = jnp.zeros((H, L1), jnp.float32)
        for kh in range(KH):
            for kw in range(KW):
                t = kh * KW + kw
                x1 = x1 + window(L1, kh - 1, kw - 1, lo1, hi1) * wdw_ref[t:t + 1, :]
        x1 = x1 * bndw_s_ref[...] + bndw_b_ref[...]
        buf[R0:R0 + H, C0:C0 + L1] = x1          # ghost channels [0:init_c]

        # ---- GhostModule.cheap_operation: grouped Adder2D 3x3 -> BN -> ReLU ----
        # Only the `kept` channels that survive out[:, :oup] are computed.
        accs = [jnp.zeros((H, NW), jnp.float32) for _ in range(kept)]
        for kh in range(KH):
            for kw in range(KW):
                t = kh * KW + kw
                win = window(L1, kh - 1, kw - 1, lo1, hi1)   # loaded once, reused per channel
                for co in range(kept):
                    g = co // (ratio - 1)                    # source channel (group) in x1
                    seg = win if init_c == 1 else win[:, g * NW:(g + 1) * NW]
                    accs[co] = accs[co] - jnp.abs(seg - wadd_ref[co, t])
        for co in range(kept):
            x2 = accs[co] * bnadd_s_ref[co] + bnadd_b_ref[co]
            x2 = jnp.maximum(x2, 0.0)
            buf[R0:R0 + H, C0 + L1 + co * NW:C0 + L1 + (co + 1) * NW] = x2

        lo2, hi2 = edge_masks(L2)

        # ---- conv2 (depthwise 3x3; bias folded into shift) -> bn2 -> +residual -> ReLU ----
        acc = jnp.zeros((H, L2), jnp.float32)
        for kh in range(KH):
            for kw in range(KW):
                t = kh * KW + kw
                acc = acc + window(L2, kh - 1, kw - 1, lo2, hi2) * wc2_ref[t:t + 1, :]
        out = acc * bn2_s_ref[...] + bn2_shift_ref[...]
        out = out + xp[:, :L2]           # residual (downsample is None -> Cin == oup)
        o_ref[...] = jnp.maximum(out, 0.0)

    return kernel


def basic_block_forward(x, P):
    N, Cin, H, W = x.shape
    init_c, new_c, oup, ratio = P['init_c'], P['new_c'], P['oup'], P['ratio']
    NW = N * W
    L1, L2 = init_c * NW, oup * NW
    ROWS, LANES = 8 + H + 8, 128 + L2 + 128

    kernel = _make_kernel(N, Cin, H, W, init_c, new_c, oup, ratio)

    # Lane-dense repack: (N, C, H, W) -> (H, C*N*W); per-channel params broadcast per lane.
    xp = x.transpose(2, 1, 0, 3).reshape(H, Cin * NW)
    wdw_lane = jnp.repeat(P['wdw'].reshape(init_c, 9).T, NW, axis=1)            # (9, L1)
    bndw_s_lane = jnp.repeat(P['bndw_s'], NW)[None, :]                          # (1, L1)
    bndw_b_lane = jnp.repeat(P['bndw_b'], NW)[None, :]
    wc2_lane = jnp.repeat(P['wc2'].reshape(oup, 9).T, NW, axis=1)               # (9, L2)
    bn2_s_lane = jnp.repeat(P['bn2_s'], NW)[None, :]                            # (1, L2)
    bn2_shift_lane = jnp.repeat(P['bn2_b'] + P['bc2'] * P['bn2_s'], NW)[None, :]

    vmem = pl.BlockSpec(memory_space=pltpu.MemorySpace.VMEM)
    smem = pl.BlockSpec(memory_space=pltpu.MemorySpace.SMEM)

    out_packed = pl.pallas_call(
        kernel,
        out_shape=jax.ShapeDtypeStruct((H, L2), jnp.float32),
        in_specs=[vmem] * 7 + [smem] * 6,
        out_specs=vmem,
        scratch_shapes=[pltpu.VMEM((ROWS, LANES), jnp.float32)],
    )(xp, wdw_lane, bndw_s_lane, bndw_b_lane,
      wc2_lane, bn2_s_lane, bn2_shift_lane,
      P['w1'], P['bn1_s'], P['bn1_b'],
      P['wadd'].reshape(new_c, 9), P['bnadd_s'], P['bnadd_b'])

    # (H, oup*N*W) -> (N, oup, H, W)
    return out_packed.reshape(H, oup, N, W).transpose(2, 1, 0, 3)


# ---------------- pure-JAX reference (for correctness check only) ----------------
def reference_forward(x, P):
    N, Cin, H, W = x.shape
    init_c, new_c, oup, ratio = P['init_c'], P['new_c'], P['oup'], P['ratio']

    y1 = jnp.einsum('oc,nchw->nohw', P['w1'], x)
    y1 = y1 * P['bn1_s'].reshape(1, -1, 1, 1) + P['bn1_b'].reshape(1, -1, 1, 1)

    yp = jnp.pad(y1, ((0, 0), (0, 0), (1, 1), (1, 1)))
    x1 = jnp.zeros((N, init_c, H, W), jnp.float32)
    for kh in range(3):
        for kw in range(3):
            x1 = x1 + P['wdw'][:, kh, kw].reshape(1, -1, 1, 1) * yp[:, :, kh:kh + H, kw:kw + W]
    x1 = x1 * P['bndw_s'].reshape(1, -1, 1, 1) + P['bndw_b'].reshape(1, -1, 1, 1)

    x1p = jnp.pad(x1, ((0, 0), (0, 0), (1, 1), (1, 1)))
    x2_list = []
    for co in range(new_c):
        g = co // (ratio - 1)
        acc = jnp.zeros((N, H, W), jnp.float32)
        for kh in range(3):
            for kw in range(3):
                acc = acc - jnp.abs(x1p[:, g, kh:kh + H, kw:kw + W] - P['wadd'][co, kh, kw])
        x2_list.append(acc)
    x2 = jnp.stack(x2_list, axis=1)
    x2 = x2 * P['bnadd_s'].reshape(1, -1, 1, 1) + P['bnadd_b'].reshape(1, -1, 1, 1)
    x2 = jnp.maximum(x2, 0.0)

    ghost = jnp.concatenate([x1, x2], axis=1)[:, :oup]

    gp = jnp.pad(ghost, ((0, 0), (0, 0), (1, 1), (1, 1)))
    out = jnp.zeros((N, oup, H, W), jnp.float32)
    for kh in range(3):
        for kw in range(3):
            out = out + P['wc2'][:, kh, kw].reshape(1, -1, 1, 1) * gp[:, :, kh:kh + H, kw:kw + W]
    out = out + P['bc2'].reshape(1, -1, 1, 1)
    out = out * P['bn2_s'].reshape(1, -1, 1, 1) + P['bn2_b'].reshape(1, -1, 1, 1)
    out = out + x
    return jnp.maximum(out, 0.0)


def _bn_params(key, C, eps=1e-5):
    k1, k2, k3, k4 = jax.random.split(key, 4)
    gamma = 1.0 + 0.1 * jax.random.normal(k1, (C,), jnp.float32)
    beta = 0.1 * jax.random.normal(k2, (C,), jnp.float32)
    mean = 0.1 * jax.random.normal(k3, (C,), jnp.float32)
    var = jax.random.uniform(k4, (C,), jnp.float32, minval=0.5, maxval=1.5)
    scale = gamma / jnp.sqrt(var + eps)
    shift = beta - mean * scale
    return scale, shift


if __name__ == "__main__":
    # BasicBlock(inplanes=4, planes=4, stride=1, downsample=None)
    N, inplanes, H, W = 2, 4, 16, 16
    planes, ratio = 4, 10
    init_c = math.ceil(planes / ratio)        # 1
    new_c = init_c * (ratio - 1)              # 9
    oup = planes                              # 4

    key = jax.random.PRNGKey(0)
    ks = jax.random.split(key, 10)

    x = jax.random.normal(ks[0], (N, inplanes, H, W), jnp.float32)

    bn1_s, bn1_b = _bn_params(ks[1], init_c)
    bndw_s, bndw_b = _bn_params(ks[2], init_c)
    bnadd_s, bnadd_b = _bn_params(ks[3], new_c)
    bn2_s, bn2_b = _bn_params(ks[4], oup)

    P = dict(
        init_c=init_c, new_c=new_c, oup=oup, ratio=ratio,
        w1=0.3 * jax.random.normal(ks[5], (init_c, inplanes), jnp.float32),
        bn1_s=bn1_s, bn1_b=bn1_b,
        wdw=0.3 * jax.random.normal(ks[6], (init_c, 3, 3), jnp.float32),
        bndw_s=bndw_s, bndw_b=bndw_b,
        wadd=0.3 * jax.random.normal(ks[7], (new_c, 3, 3), jnp.float32),
        bnadd_s=bnadd_s, bnadd_b=bnadd_b,
        wc2=0.3 * jax.random.normal(ks[8], (oup, 3, 3), jnp.float32),
        bc2=0.1 * jax.random.normal(ks[9], (oup,), jnp.float32),
        bn2_s=bn2_s, bn2_b=bn2_b,
    )

    out = basic_block_forward(x, P)
    out = jax.block_until_ready(out)

    ref = reference_forward(x, P)
    assert out.shape == (N, planes, H, W)
    np.testing.assert_allclose(np.asarray(out), np.asarray(ref), atol=1e-4, rtol=1e-4)

    print("KERNEL_OK")
</pallas_src>

<mosaic_0001>
module attributes {stable_mosaic.version = 11 : i64} {
  func.func @kernel(%arg0: memref<16x128xf32, #tpu.memory_space<vmem>>, %arg1: memref<9x32xf32, #tpu.memory_space<vmem>>, %arg2: memref<1x32xf32, #tpu.memory_space<vmem>>, %arg3: memref<1x32xf32, #tpu.memory_space<vmem>>, %arg4: memref<9x128xf32, #tpu.memory_space<vmem>>, %arg5: memref<1x128xf32, #tpu.memory_space<vmem>>, %arg6: memref<1x128xf32, #tpu.memory_space<vmem>>, %arg7: memref<1x4xf32, #tpu.memory_space<smem>>, %arg8: memref<1xf32, #tpu.memory_space<smem>>, %arg9: memref<1xf32, #tpu.memory_space<smem>>, %arg10: memref<9x9xf32, #tpu.memory_space<smem>>, %arg11: memref<9xf32, #tpu.memory_space<smem>>, %arg12: memref<9xf32, #tpu.memory_space<smem>>, %arg13: memref<16x128xf32, #tpu.memory_space<vmem>>, %arg14: memref<32x384xf32, #tpu.memory_space<vmem>>) attributes {dimension_semantics = [], scalar_prefetch = 0 : i64, scratch_operands = 1 : i64, tpu.core_type = #tpu.core_type<tc>} {
    %cst = arith.constant 0.000000e+00 : f32
    %0 = vector.broadcast %cst : f32 to vector<32x384xf32>
    %c0 = arith.constant 0 : index
    %c0_0 = arith.constant 0 : index
    %1 = vector.load %arg14[%c0, %c0_0] : memref<32x384xf32, #tpu.memory_space<vmem>>, vector<32x384xf32>
    tpu.vector_store %arg14[%c0, %c0_0], %0 {strides = array<i32>} : memref<32x384xf32, #tpu.memory_space<vmem>>, vector<32x384xf32>,
    %c0_1 = arith.constant 0 : index
    %c0_2 = arith.constant 0 : index
    %2 = vector.load %arg0[%c0_1, %c0_2] : memref<16x128xf32, #tpu.memory_space<vmem>>, vector<16x128xf32>
    %cst_3 = arith.constant 0.000000e+00 : f32
    %3 = vector.broadcast %cst_3 : f32 to vector<16x32xf32>
    %c0_4 = arith.constant 0 : index
    %c0_5 = arith.constant 0 : index
    %4 = memref.load %arg7[%c0_4, %c0_5] : memref<1x4xf32, #tpu.memory_space<smem>>
    %5 = vector.extract_strided_slice %2 {offsets = [0, 0], sizes = [16, 32], strides = [1, 1]} : vector<16x128xf32> to vector<16x32xf32>
    %6 = vector.broadcast %4 : f32 to vector<16x32xf32>
    %7 = arith.mulf %6, %5 : vector<16x32xf32>
    %8 = arith.addf %3, %7 : vector<16x32xf32>
    %c0_6 = arith.constant 0 : index
    %c1 = arith.constant 1 : index
    %9 = memref.load %arg7[%c0_6, %c1] : memref<1x4xf32, #tpu.memory_space<smem>>
    %10 = vector.extract_strided_slice %2 {offsets = [0, 32], sizes = [16, 32], strides = [1, 1]} : vector<16x128xf32> to vector<16x32xf32>
    %11 = vector.broadcast %9 : f32 to vector<16x32xf32>
    %12 = arith.mulf %11, %10 : vector<16x32xf32>
    %13 = arith.addf %8, %12 : vector<16x32xf32>
    %c0_7 = arith.constant 0 : index
    %c2 = arith.constant 2 : index
    %14 = memref.load %arg7[%c0_7, %c2] : memref<1x4xf32, #tpu.memory_space<smem>>
    %15 = vector.extract_strided_slice %2 {offsets = [0, 64], sizes = [16, 32], strides = [1, 1]} : vector<16x128xf32> to vector<16x32xf32>
    %16 = vector.broadcast %14 : f32 to vector<16x32xf32>
    %17 = arith.mulf %16, %15 : vector<16x32xf32>
    %18 = arith.addf %13, %17 : vector<16x32xf32>
    %c0_8 = arith.constant 0 : index
    %c3 = arith.constant 3 : index
    %19 = memref.load %arg7[%c0_8, %c3] : memref<1x4xf32, #tpu.memory_space<smem>>
    %20 = vector.extract_strided_slice %2 {offsets = [0, 96], sizes = [16, 32], strides = [1, 1]} : vector<16x128xf32> to vector<16x32xf32>
    %21 = vector.broadcast %19 : f32 to vector<16x32xf32>
    %22 = arith.mulf %21, %20 : vector<16x32xf32>
    %23 = arith.addf %18, %22 : vector<16x32xf32>
    %c0_9 = arith.constant 0 : index
    %24 = memref.load %arg8[%c0_9] : memref<1xf32, #tpu.memory_space<smem>>
    %25 = vector.broadcast %24 : f32 to vector<16x32xf32>
    %26 = arith.mulf %23, %25 : vector<16x32xf32>
    %c0_10 = arith.constant 0 : index
    %27 = memref.load %arg9[%c0_10] : memref<1xf32, #tpu.memory_space<smem>>
    %28 = vector.broadcast %27 : f32 to vector<16x32xf32>
    %29 = arith.addf %26, %28 : vector<16x32xf32>
    %c8 = arith.constant 8 : index
    %c128 = arith.constant 128 : index
    %30 = vector.load %arg14[%c8, %c128] : memref<32x384xf32, #tpu.memory_space<vmem>>, vector<16x32xf32>
    tpu.vector_store %arg14[%c8, %c128], %29 {strides = array<i32>} : memref<32x384xf32, #tpu.memory_space<vmem>>, vector<16x32xf32>,
    %31 = tpu.iota {dimensions = array<i32: 1>} : vector<16x32xi32>
    %c16_i32 = arith.constant 16 : i32
    %c0_i32 = arith.constant 0 : i32
    %32 = arith.cmpi eq, %c16_i32, %c0_i32 : i32
    %c1_i32 = arith.constant 1 : i32
    %33 = arith.select %32, %c1_i32, %c16_i32 : i32
    %34 = vector.broadcast %33 : i32 to vector<16x32xi32>
    %35 = arith.remsi %31, %34 : vector<16x32xi32>
    %c0_i32_11 = arith.constant 0 : i32
    %36 = vector.broadcast %c0_i32_11 : i32 to vector<16x32xi32>
    %37 = arith.cmpi ne, %35, %36 : vector<16x32xi32>
    %c0_i32_12 = arith.constant 0 : i32
    %38 = vector.broadcast %c0_i32_12 : i32 to vector<16x32xi32>
    %39 = arith.cmpi slt, %35, %38 : vector<16x32xi32>
    %c0_i32_13 = arith.constant 0 : i32
    %40 = arith.cmpi slt, %33, %c0_i32_13 : i32
    %41 = vector.broadcast %40 : i1 to vector<16x32xi1>
    %42 = vector.broadcast %41 : vector<16x32xi1> to vector<16x32xi1>
    %43 = arith.xori %39, %42 : vector<16x32xi1>
    %44 = arith.andi %43, %37 : vector<16x32xi1>
    %45 = vector.broadcast %33 : i32 to vector<16x32xi32>
    %46 = arith.addi %35, %45 : vector<16x32xi32>
    %47 = arith.select %44, %46, %35 : vector<16x32xi1>, vector<16x32xi32>
    %c0_i32_14 = arith.constant 0 : i32
    %48 = vector.broadcast %c0_i32_14 : i32 to vector<16x32xi32>
    %49 = arith.cmpi eq, %47, %48 : vector<16x32xi32>
    %c15_i32 = arith.constant 15 : i32
    %50 = vector.broadcast %c15_i32 : i32 to vector<16x32xi32>
    %51 = arith.cmpi eq, %47, %50 : vector<16x32xi32>
    %cst_15 = arith.constant 0.000000e+00 : f32
    %52 = vector.broadcast %cst_15 : f32 to vector<16x32xf32>
    %c7 = arith.constant 7 : index
    %c127 = arith.constant 127 : index
    %53 = vector.load %arg14[%c7, %c127] : memref<32x384xf32, #tpu.memory_space<vmem>>, vector<16x32xf32>
    %cst_16 = arith.constant 0.000000e+00 : f32
    %54 = vector.broadcast %cst_16 : f32 to vector<16x32xf32>
    %55 = arith.select %49, %54, %53 : vector<16x32xi1>, vector<16x32xf32>
    %c0_17 = arith.constant 0 : index
    %c0_18 = arith.constant 0 : index
    %56 = vector.load %arg1[%c0_17, %c0_18] : memref<9x32xf32, #tpu.memory_space<vmem>>, vector<1x32xf32>
    %57 = vector.broadcast %56 : vector<1x32xf32> to vector<16x32xf32>
    %58 = arith.mulf %55, %57 : vector<16x32xf32>
    %59 = arith.addf %52, %58 : vector<16x32xf32>
    %c7_19 = arith.constant 7 : index
    %c128_20 = arith.constant 128 : index
    %60 = vector.load %arg14[%c7_19, %c128_20] : memref<32x384xf32, #tpu.memory_space<vmem>>, vector<16x32xf32>
    %c1_21 = arith.constant 1 : index
    %c0_22 = arith.constant 0 : index
    %61 = vector.load %arg1[%c1_21, %c0_22] : memref<9x32xf32, #tpu.memory_space<vmem>>, vector<1x32xf32>
    %62 = vector.broadcast %61 : vector<1x32xf32> to vector<16x32xf32>
    %63 = arith.mulf %60, %62 : vector<16x32xf32>
    %64 = arith.addf %59, %63 : vector<16x32xf32>
    %c7_23 = arith.constant 7 : index
    %c129 = arith.constant 129 : index
    %65 = vector.load %arg14[%c7_23, %c129] : memref<32x384xf32, #tpu.memory_space<vmem>>, vector<16x32xf32>
    %cst_24 = arith.constant 0.000000e+00 : f32
    %66 = vector.broadcast %cst_24 : f32 to vector<16x32xf32>
    %67 = arith.select %51, %66, %65 : vector<16x32xi1>, vector<16x32xf32>
    %c2_25 = arith.constant 2 : index
    %c0_26 = arith.constant 0 : index
    %68 = vector.load %arg1[%c2_25, %c0_26] : memref<9x32xf32, #tpu.memory_space<vmem>>, vector<1x32xf32>
    %69 = vector.broadcast %68 : vector<1x32xf32> to vector<16x32xf32>
    %70 = arith.mulf %67, %69 : vector<16x32xf32>
    %71 = arith.addf %64, %70 : vector<16x32xf32>
    %c8_27 = arith.constant 8 : index
    %c127_28 = arith.constant 127 : index
    %72 = vector.load %arg14[%c8_27, %c127_28] : memref<32x384xf32, #tpu.memory_space<vmem>>, vector<16x32xf32>
    %cst_29 = arith.constant 0.000000e+00 : f32
    %73 = vector.broadcast %cst_29 : f32 to vector<16x32xf32>
    %74 = arith.select %49, %73, %72 : vector<16x32xi1>, vector<16x32xf32>
    %c3_30 = arith.constant 3 : index
    %c0_31 = arith.constant 0 : index
    %75 = vector.load %arg1[%c3_30, %c0_31] : memref<9x32xf32, #tpu.memory_space<vmem>>, vector<1x32xf32>
    %76 = vector.broadcast %75 : vector<1x32xf32> to vector<16x32xf32>
    %77 = arith.mulf %74, %76 : vector<16x32xf32>
    %78 = arith.addf %71, %77 : vector<16x32xf32>
    %c8_32 = arith.constant 8 : index
    %c128_33 = arith.constant 128 : index
    %79 = vector.load %arg14[%c8_32, %c128_33] : memref<32x384xf32, #tpu.memory_space<vmem>>, vector<16x32xf32>
    %c4 = arith.constant 4 : index
    %c0_34 = arith.constant 0 : index
    %80 = vector.load %arg1[%c4, %c0_34] : memref<9x32xf32, #tpu.memory_space<vmem>>, vector<1x32xf32>
    %81 = vector.broadcast %80 : vector<1x32xf32> to vector<16x32xf32>
    %82 = arith.mulf %79, %81 : vector<16x32xf32>
    %83 = arith.addf %78, %82 : vector<16x32xf32>
    %c8_35 = arith.constant 8 : index
    %c129_36 = arith.constant 129 : index
    %84 = vector.load %arg14[%c8_35, %c129_36] : memref<32x384xf32, #tpu.memory_space<vmem>>, vector<16x32xf32>
    %cst_37 = arith.constant 0.000000e+00 : f32
    %85 = vector.broadcast %cst_37 : f32 to vector<16x32xf32>
    %86 = arith.select %51, %85, %84 : vector<16x32xi1>, vector<16x32xf32>
    %c5 = arith.constant 5 : index
    %c0_38 = arith.constant 0 : index
    %87 = vector.load %arg1[%c5, %c0_38] : memref<9x32xf32, #tpu.memory_space<vmem>>, vector<1x32xf32>
    %88 = vector.broadcast %87 : vector<1x32xf32> to vector<16x32xf32>
    %89 = arith.mulf %86, %88 : vector<16x32xf32>
    %90 = arith.addf %83, %89 : vector<16x32xf32>
    %c9 = arith.constant 9 : index
    %c127_39 = arith.constant 127 : index
    %91 = vector.load %arg14[%c9, %c127_39] : memref<32x384xf32, #tpu.memory_space<vmem>>, vector<16x32xf32>
    %cst_40 = arith.constant 0.000000e+00 : f32
    %92 = vector.broadcast %cst_40 : f32 to vector<16x32xf32>
    %93 = arith.select %49, %92, %91 : vector<16x32xi1>, vector<16x32xf32>
    %c6 = arith.constant 6 : index
    %c0_41 = arith.constant 0 : index
    %94 = vector.load %arg1[%c6, %c0_41] : memref<9x32xf32, #tpu.memory_space<vmem>>, vector<1x32xf32>
    %95 = vector.broadcast %94 : vector<1x32xf32> to vector<16x32xf32>
    %96 = arith.mulf %93, %95 : vector<16x32xf32>
    %97 = arith.addf %90, %96 : vector<16x32xf32>
    %c9_42 = arith.constant 9 : index
    %c128_43 = arith.constant 128 : index
    %98 = vector.load %arg14[%c9_42, %c128_43] : memref<32x384xf32, #tpu.memory_space<vmem>>, vector<16x32xf32>
    %c7_44 = arith.constant 7 : index
    %c0_45 = arith.constant 0 : index
    %99 = vector.load %arg1[%c7_44, %c0_45] : memref<9x32xf32, #tpu.memory_space<vmem>>, vector<1x32xf32>
    %100 = vector.broadcast %99 : vector<1x32xf32> to vector<16x32xf32>
    %101 = arith.mulf %98, %100 : vector<16x32xf32>
    %102 = arith.addf %97, %101 : vector<16x32xf32>
    %c9_46 = arith.constant 9 : index
    %c129_47 = arith.constant 129 : index
    %103 = vector.load %arg14[%c9_46, %c129_47] : memref<32x384xf32, #tpu.memory_space<vmem>>, vector<16x32xf32>
    %cst_48 = arith.constant 0.000000e+00 : f32
    %104 = vector.broadcast %cst_48 : f32 to vector<16x32xf32>
    %105 = arith.select %51, %104, %103 : vector<16x32xi1>, vector<16x32xf32>
    %c8_49 = arith.constant 8 : index
    %c0_50 = arith.constant 0 : index
    %106 = vector.load %arg1[%c8_49, %c0_50] : memref<9x32xf32, #tpu.memory_space<vmem>>, vector<1x32xf32>
    %107 = vector.broadcast %106 : vector<1x32xf32> to vector<16x32xf32>
    %108 = arith.mulf %105, %107 : vector<16x32xf32>
    %109 = arith.addf %102, %108 : vector<16x32xf32>
    %c0_51 = arith.constant 0 : index
    %c0_52 = arith.constant 0 : index
    %110 = vector.load %arg2[%c0_51, %c0_52] : memref<1x32xf32, #tpu.memory_space<vmem>>, vector<1x32xf32>
    %111 = vector.broadcast %110 : vector<1x32xf32> to vector<16x32xf32>
    %112 = arith.mulf %109, %111 : vector<16x32xf32>
    %c0_53 = arith.constant 0 : index
    %c0_54 = arith.constant 0 : index
    %113 = vector.load %arg3[%c0_53, %c0_54] : memref<1x32xf32, #tpu.memory_space<vmem>>, vector<1x32xf32>
    %114 = vector.broadcast %113 : vector<1x32xf32> to vector<16x32xf32>
    %115 = arith.addf %112, %114 : vector<16x32xf32>
    %c8_55 = arith.constant 8 : index
    %c128_56 = arith.constant 128 : index
    %116 = vector.load %arg14[%c8_55, %c128_56] : memref<32x384xf32, #tpu.memory_space<vmem>>, vector<16x32xf32>
    tpu.vector_store %arg14[%c8_55, %c128_56], %115 {strides = array<i32>} : memref<32x384xf32, #tpu.memory_space<vmem>>, vector<16x32xf32>,
    %cst_57 = arith.constant 0.000000e+00 : f32
    %117 = vector.broadcast %cst_57 : f32 to vector<16x32xf32>
    %cst_58 = arith.constant 0.000000e+00 : f32
    %118 = vector.broadcast %cst_58 : f32 to vector<16x32xf32>
    %cst_59 = arith.constant 0.000000e+00 : f32
    %119 = vector.broadcast %cst_59 : f32 to vector<16x32xf32>
    %c7_60 = arith.constant 7 : index
    %c127_61 = arith.constant 127 : index
    %120 = vector.load %arg14[%c7_60, %c127_61] : memref<32x384xf32, #tpu.memory_space<vmem>>, vector<16x32xf32>
    %cst_62 = arith.constant 0.000000e+00 : f32
    %121 = vector.broadcast %cst_62 : f32 to vector<16x32xf32>
    %122 = arith.select %49, %121, %120 : vector<16x32xi1>, vector<16x32xf32>
    %c0_63 = arith.constant 0 : index
    %c0_64 = arith.constant 0 : index
    %123 = memref.load %arg10[%c0_63, %c0_64] : memref<9x9xf32, #tpu.memory_space<smem>>
    %124 = vector.broadcast %123 : f32 to vector<16x32xf32>
    %125 = arith.subf %122, %124 : vector<16x32xf32>
    %126 = math.absf %125 : vector<16x32xf32>
    %127 = arith.subf %117, %126 : vector<16x32xf32>
    %c1_65 = arith.constant 1 : index
    %c0_66 = arith.constant 0 : index
    %128 = memref.load %arg10[%c1_65, %c0_66] : memref<9x9xf32, #tpu.memory_space<smem>>
    %129 = vector.broadcast %128 : f32 to vector<16x32xf32>
    %130 = arith.subf %122, %129 : vector<16x32xf32>
    %131 = math.absf %130 : vector<16x32xf32>
    %132 = arith.subf %118, %131 : vector<16x32xf32>
    %c2_67 = arith.constant 2 : index
    %c0_68 = arith.constant 0 : index
    %133 = memref.load %arg10[%c2_67, %c0_68] : memref<9x9xf32, #tpu.memory_space<smem>>
    %134 = vector.broadcast %133 : f32 to vector<16x32xf32>
    %135 = arith.subf %122, %134 : vector<16x32xf32>
    %136 = math.absf %135 : vector<16x32xf32>
    %137 = arith.subf %119, %136 : vector<16x32xf32>
    %c7_69 = arith.constant 7 : index
    %c128_70 = arith.constant 128 : index
    %138 = vector.load %arg14[%c7_69, %c128_70] : memref<32x384xf32, #tpu.memory_space<vmem>>, vector<16x32xf32>
    %c0_71 = arith.constant 0 : index
    %c1_72 = arith.constant 1 : index
    %139 = memref.load %arg10[%c0_71, %c1_72] : memref<9x9xf32, #tpu.memory_space<smem>>
    %140 = vector.broadcast %139 : f32 to vector<16x32xf32>
    %141 = arith.subf %138, %140 : vector<16x32xf32>
    %142 = math.absf %141 : vector<16x32xf32>
    %143 = arith.subf %127, %142 : vector<16x32xf32>
    %c1_73 = arith.constant 1 : index
    %c1_74 = arith.constant 1 : index
    %144 = memref.load %arg10[%c1_73, %c1_74] : memref<9x9xf32, #tpu.memory_space<smem>>
    %145 = vector.broadcast %144 : f32 to vector<16x32xf32>
    %146 = arith.subf %138, %145 : vector<16x32xf32>
    %147 = math.absf %146 : vector<16x32xf32>
    %148 = arith.subf %132, %147 : vector<16x32xf32>
    %c2_75 = arith.constant 2 : index
    %c1_76 = arith.constant 1 : index
    %149 = memref.load %arg10[%c2_75, %c1_76] : memref<9x9xf32, #tpu.memory_space<smem>>
    %150 = vector.broadcast %149 : f32 to vector<16x32xf32>
    %151 = arith.subf %138, %150 : vector<16x32xf32>
    %152 = math.absf %151 : vector<16x32xf32>
    %153 = arith.subf %137, %152 : vector<16x32xf32>
    %c7_77 = arith.constant 7 : index
    %c129_78 = arith.constant 129 : index
    %154 = vector.load %arg14[%c7_77, %c129_78] : memref<32x384xf32, #tpu.memory_space<vmem>>, vector<16x32xf32>
    %cst_79 = arith.constant 0.000000e+00 : f32
    %155 = vector.broadcast %cst_79 : f32 to vector<16x32xf32>
    %156 = arith.select %51, %155, %154 : vector<16x32xi1>, vector<16x32xf32>
    %c0_80 = arith.constant 0 : index
    %c2_81 = arith.constant 2 : index
    %157 = memref.load %arg10[%c0_80, %c2_81] : memref<9x9xf32, #tpu.memory_space<smem>>
    %158 = vector.broadcast %157 : f32 to vector<16x32xf32>
    %159 = arith.subf %156, %158 : vector<16x32xf32>
    %160 = math.absf %159 : vector<16x32xf32>
    %161 = arith.subf %143, %160 : vector<16x32xf32>
    %c1_82 = arith.constant 1 : index
    %c2_83 = arith.constant 2 : index
    %162 = memref.load %arg10[%c1_82, %c2_83] : memref<9x9xf32, #tpu.memory_space<smem>>
    %163 = vector.broadcast %162 : f32 to vector<16x32xf32>
    %164 = arith.subf %156, %163 : vector<16x32xf32>
    %165 = math.absf %164 : vector<16x32xf32>
    %166 = arith.subf %148, %165 : vector<16x32xf32>
    %c2_84 = arith.constant 2 : index
    %c2_85 = arith.constant 2 : index
    %167 = memref.load %arg10[%c2_84, %c2_85] : memref<9x9xf32, #tpu.memory_space<smem>>
    %168 = vector.broadcast %167 : f32 to vector<16x32xf32>
    %169 = arith.subf %156, %168 : vector<16x32xf32>
    %170 = math.absf %169 : vector<16x32xf32>
    %171 = arith.subf %153, %170 : vector<16x32xf32>
    %c8_86 = arith.constant 8 : index
    %c127_87 = arith.constant 127 : index
    %172 = vector.load %arg14[%c8_86, %c127_87] : memref<32x384xf32, #tpu.memory_space<vmem>>, vector<16x32xf32>
    %cst_88 = arith.constant 0.000000e+00 : f32
    %173 = vector.broadcast %cst_88 : f32 to vector<16x32xf32>
    %174 = arith.select %49, %173, %172 : vector<16x32xi1>, vector<16x32xf32>
    %c0_89 = arith.constant 0 : index
    %c3_90 = arith.constant 3 : index
    %175 = memref.load %arg10[%c0_89, %c3_90] : memref<9x9xf32, #tpu.memory_space<smem>>
    %176 = vector.broadcast %175 : f32 to vector<16x32xf32>
    %177 = arith.subf %174, %176 : vector<16x32xf32>
    %178 = math.absf %177 : vector<16x32xf32>
    %179 = arith.subf %161, %178 : vector<16x32xf32>
    %c1_91 = arith.constant 1 : index
    %c3_92 = arith.constant 3 : index
    %180 = memref.load %arg10[%c1_91, %c3_92] : memref<9x9xf32, #tpu.memory_space<smem>>
    %181 = vector.broadcast %180 : f32 to vector<16x32xf32>
    %182 = arith.subf %174, %181 : vector<16x32xf32>
    %183 = math.absf %182 : vector<16x32xf32>
    %184 = arith.subf %166, %183 : vector<16x32xf32>
    %c2_93 = arith.constant 2 : index
    %c3_94 = arith.constant 3 : index
    %185 = memref.load %arg10[%c2_93, %c3_94] : memref<9x9xf32, #tpu.memory_space<smem>>
    %186 = vector.broadcast %185 : f32 to vector<16x32xf32>
    %187 = arith.subf %174, %186 : vector<16x32xf32>
    %188 = math.absf %187 : vector<16x32xf32>
    %189 = arith.subf %171, %188 : vector<16x32xf32>
    %c8_95 = arith.constant 8 : index
    %c128_96 = arith.constant 128 : index
    %190 = vector.load %arg14[%c8_95, %c128_96] : memref<32x384xf32, #tpu.memory_space<vmem>>, vector<16x32xf32>
    %c0_97 = arith.constant 0 : index
    %c4_98 = arith.constant 4 : index
    %191 = memref.load %arg10[%c0_97, %c4_98] : memref<9x9xf32, #tpu.memory_space<smem>>
    %192 = vector.broadcast %191 : f32 to vector<16x32xf32>
    %193 = arith.subf %190, %192 : vector<16x32xf32>
    %194 = math.absf %193 : vector<16x32xf32>
    %195 = arith.subf %179, %194 : vector<16x32xf32>
    %c1_99 = arith.constant 1 : index
    %c4_100 = arith.constant 4 : index
    %196 = memref.load %arg10[%c1_99, %c4_100] : memref<9x9xf32, #tpu.memory_space<smem>>
    %197 = vector.broadcast %196 : f32 to vector<16x32xf32>
    %198 = arith.subf %190, %197 : vector<16x32xf32>
    %199 = math.absf %198 : vector<16x32xf32>
    %200 = arith.subf %184, %199 : vector<16x32xf32>
    %c2_101 = arith.constant 2 : index
    %c4_102 = arith.constant 4 : index
    %201 = memref.load %arg10[%c2_101, %c4_102] : memref<9x9xf32, #tpu.memory_space<smem>>
    %202 = vector.broadcast %201 : f32 to vector<16x32xf32>
    %203 = arith.subf %190, %202 : vector<16x32xf32>
    %204 = math.absf %203 : vector<16x32xf32>
    %205 = arith.subf %189, %204 : vector<16x32xf32>
    %c8_103 = arith.constant 8 : index
    %c129_104 = arith.constant 129 : index
    %206 = vector.load %arg14[%c8_103, %c129_104] : memref<32x384xf32, #tpu.memory_space<vmem>>, vector<16x32xf32>
    %cst_105 = arith.constant 0.000000e+00 : f32
    %207 = vector.broadcast %cst_105 : f32 to vector<16x32xf32>
    %208 = arith.select %51, %207, %206 : vector<16x32xi1>, vector<16x32xf32>
    %c0_106 = arith.constant 0 : index
    %c5_107 = arith.constant 5 : index
    %209 = memref.load %arg10[%c0_106, %c5_107] : memref<9x9xf32, #tpu.memory_space<smem>>
    %210 = vector.broadcast %209 : f32 to vector<16x32xf32>
    %211 = arith.subf %208, %210 : vector<16x32xf32>
    %212 = math.absf %211 : vector<16x32xf32>
    %213 = arith.subf %195, %212 : vector<16x32xf32>
    %c1_108 = arith.constant 1 : index
    %c5_109 = arith.constant 5 : index
    %214 = memref.load %arg10[%c1_108, %c5_109] : memref<9x9xf32, #tpu.memory_space<smem>>
    %215 = vector.broadcast %214 : f32 to vector<16x32xf32>
    %216 = arith.subf %208, %215 : vector<16x32xf32>
    %217 = math.absf %216 : vector<16x32xf32>
    %218 = arith.subf %200, %217 : vector<16x32xf32>
    %c2_110 = arith.constant 2 : index
    %c5_111 = arith.constant 5 : index
    %219 = memref.load %arg10[%c2_110, %c5_111] : memref<9x9xf32, #tpu.memory_space<smem>>
    %220 = vector.broadcast %219 : f32 to vector<16x32xf32>
    %221 = arith.subf %208, %220 : vector<16x32xf32>
    %222 = math.absf %221 : vector<16x32xf32>
    %223 = arith.subf %205, %222 : vector<16x32xf32>
    %c9_112 = arith.constant 9 : index
    %c127_113 = arith.constant 127 : index
    %224 = vector.load %arg14[%c9_112, %c127_113] : memref<32x384xf32, #tpu.memory_space<vmem>>, vector<16x32xf32>
    %cst_114 = arith.constant 0.000000e+00 : f32
    %225 = vector.broadcast %cst_114 : f32 to vector<16x32xf32>
    %226 = arith.select %49, %225, %224 : vector<16x32xi1>, vector<16x32xf32>
    %c0_115 = arith.constant 0 : index
    %c6_116 = arith.constant 6 : index
    %227 = memref.load %arg10[%c0_115, %c6_116] : memref<9x9xf32, #tpu.memory_space<smem>>
    %228 = vector.broadcast %227 : f32 to vector<16x32xf32>
    %229 = arith.subf %226, %228 : vector<16x32xf32>
    %230 = math.absf %229 : vector<16x32xf32>
    %231 = arith.subf %213, %230 : vector<16x32xf32>
    %c1_117 = arith.constant 1 : index
    %c6_118 = arith.constant 6 : index
    %232 = memref.load %arg10[%c1_117, %c6_118] : memref<9x9xf32, #tpu.memory_space<smem>>
    %233 = vector.broadcast %232 : f32 to vector<16x32xf32>
    %234 = arith.subf %226, %233 : vector<16x32xf32>
    %235 = math.absf %234 : vector<16x32xf32>
    %236 = arith.subf %218, %235 : vector<16x32xf32>
    %c2_119 = arith.constant 2 : index
    %c6_120 = arith.constant 6 : index
    %237 = memref.load %arg10[%c2_119, %c6_120] : memref<9x9xf32, #tpu.memory_space<smem>>
    %238 = vector.broadcast %237 : f32 to vector<16x32xf32>
    %239 = arith.subf %226, %238 : vector<16x32xf32>
    %240 = math.absf %239 : vector<16x32xf32>
    %241 = arith.subf %223, %240 : vector<16x32xf32>
    %c9_121 = arith.constant 9 : index
    %c128_122 = arith.constant 128 : index
    %242 = vector.load %arg14[%c9_121, %c128_122] : memref<32x384xf32, #tpu.memory_space<vmem>>, vector<16x32xf32>
    %c0_123 = arith.constant 0 : index
    %c7_124 = arith.constant 7 : index
    %243 = memref.load %arg10[%c0_123, %c7_124] : memref<9x9xf32, #tpu.memory_space<smem>>
    %244 = vector.broadcast %243 : f32 to vector<16x32xf32>
    %245 = arith.subf %242, %244 : vector<16x32xf32>
    %246 = math.absf %245 : vector<16x32xf32>
    %247 = arith.subf %231, %246 : vector<16x32xf32>
    %c1_125 = arith.constant 1 : index
    %c7_126 = arith.constant 7 : index
    %248 = memref.load %arg10[%c1_125, %c7_126] : memref<9x9xf32, #tpu.memory_space<smem>>
    %249 = vector.broadcast %248 : f32 to vector<16x32xf32>
    %250 = arith.subf %242, %249 : vector<16x32xf32>
    %251 = math.absf %250 : vector<16x32xf32>
    %252 = arith.subf %236, %251 : vector<16x32xf32>
    %c2_127 = arith.constant 2 : index
    %c7_128 = arith.constant 7 : index
    %253 = memref.load %arg10[%c2_127, %c7_128] : memref<9x9xf32, #tpu.memory_space<smem>>
    %254 = vector.broadcast %253 : f32 to vector<16x32xf32>
    %255 = arith.subf %242, %254 : vector<16x32xf32>
    %256 = math.absf %255 : vector<16x32xf32>
    %257 = arith.subf %241, %256 : vector<16x32xf32>
    %c9_129 = arith.constant 9 : index
    %c129_130 = arith.constant 129 : index
    %258 = vector.load %arg14[%c9_129, %c129_130] : memref<32x384xf32, #tpu.memory_space<vmem>>, vector<16x32xf32>
    %cst_131 = arith.constant 0.000000e+00 : f32
    %259 = vector.broadcast %cst_131 : f32 to vector<16x32xf32>
    %260 = arith.select %51, %259, %258 : vector<16x32xi1>, vector<16x32xf32>
    %c0_132 = arith.constant 0 : index
    %c8_133 = arith.constant 8 : index
    %261 = memref.load %arg10[%c0_132, %c8_133] : memref<9x9xf32, #tpu.memory_space<smem>>
    %262 = vector.broadcast %261 : f32 to vector<16x32xf32>
    %263 = arith.subf %260, %262 : vector<16x32xf32>
    %264 = math.absf %263 : vector<16x32xf32>
    %265 = arith.subf %247, %264 : vector<16x32xf32>
    %c1_134 = arith.constant 1 : index
    %c8_135 = arith.constant 8 : index
    %266 = memref.load %arg10[%c1_134, %c8_135] : memref<9x9xf32, #tpu.memory_space<smem>>
    %267 = vector.broadcast %266 : f32 to vector<16x32xf32>
    %268 = arith.subf %260, %267 : vector<16x32xf32>
    %269 = math.absf %268 : vector<16x32xf32>
    %270 = arith.subf %252, %269 : vector<16x32xf32>
    %c2_136 = arith.constant 2 : index
    %c8_137 = arith.constant 8 : index
    %271 = memref.load %arg10[%c2_136, %c8_137] : memref<9x9xf32, #tpu.memory_space<smem>>
    %272 = vector.broadcast %271 : f32 to vector<16x32xf32>
    %273 = arith.subf %260, %272 : vector<16x32xf32>
    %274 = math.absf %273 : vector<16x32xf32>
    %275 = arith.subf %257, %274 : vector<16x32xf32>
    %c0_138 = arith.constant 0 : index
    %276 = memref.load %arg11[%c0_138] : memref<9xf32, #tpu.memory_space<smem>>
    %277 = vector.broadcast %276 : f32 to vector<16x32xf32>
    %278 = arith.mulf %265, %277 : vector<16x32xf32>
    %c0_139 = arith.constant 0 : index
    %279 = memref.load %arg12[%c0_139] : memref<9xf32, #tpu.memory_space<smem>>
    %280 = vector.broadcast %279 : f32 to vector<16x32xf32>
    %281 = arith.addf %278, %280 : vector<16x32xf32>
    %cst_140 = arith.constant 0.000000e+00 : f32
    %282 = vector.broadcast %cst_140 : f32 to vector<16x32xf32>
    %283 = arith.maximumf %281, %282 : vector<16x32xf32>
    %c8_141 = arith.constant 8 : index
    %c160 = arith.constant 160 : index
    %284 = vector.load %arg14[%c8_141, %c160] : memref<32x384xf32, #tpu.memory_space<vmem>>, vector<16x32xf32>
    tpu.vector_store %arg14[%c8_141, %c160], %283 {strides = array<i32>} : memref<32x384xf32, #tpu.memory_space<vmem>>, vector<16x32xf32>,
    %c1_142 = arith.constant 1 : index
    %285 = memref.load %arg11[%c1_142] : memref<9xf32, #tpu.memory_space<smem>>
    %286 = vector.broadcast %285 : f32 to vector<16x32xf32>
    %287 = arith.mulf %270, %286 : vector<16x32xf32>
    %c1_143 = arith.constant 1 : index
    %288 = memref.load %arg12[%c1_143] : memref<9xf32, #tpu.memory_space<smem>>
    %289 = vector.broadcast %288 : f32 to vector<16x32xf32>
    %290 = arith.addf %287, %289 : vector<16x32xf32>
    %cst_144 = arith.constant 0.000000e+00 : f32
    %291 = vector.broadcast %cst_144 : f32 to vector<16x32xf32>
    %292 = arith.maximumf %290, %291 : vector<16x32xf32>
    %c8_145 = arith.constant 8 : index
    %c192 = arith.constant 192 : index
    %293 = vector.load %arg14[%c8_145, %c192] : memref<32x384xf32, #tpu.memory_space<vmem>>, vector<16x32xf32>
    tpu.vector_store %arg14[%c8_145, %c192], %292 {strides = array<i32>} : memref<32x384xf32, #tpu.memory_space<vmem>>, vector<16x32xf32>,
    %c2_146 = arith.constant 2 : index
    %294 = memref.load %arg11[%c2_146] : memref<9xf32, #tpu.memory_space<smem>>
    %295 = vector.broadcast %294 : f32 to vector<16x32xf32>
    %296 = arith.mulf %275, %295 : vector<16x32xf32>
    %c2_147 = arith.constant 2 : index
    %297 = memref.load %arg12[%c2_147] : memref<9xf32, #tpu.memory_space<smem>>
    %298 = vector.broadcast %297 : f32 to vector<16x32xf32>
    %299 = arith.addf %296, %298 : vector<16x32xf32>
    %cst_148 = arith.constant 0.000000e+00 : f32
    %300 = vector.broadcast %cst_148 : f32 to vector<16x32xf32>
    %301 = arith.maximumf %299, %300 : vector<16x32xf32>
    %c8_149 = arith.constant 8 : index
    %c224 = arith.constant 224 : index
    %302 = vector.load %arg14[%c8_149, %c224] : memref<32x384xf32, #tpu.memory_space<vmem>>, vector<16x32xf32>
    tpu.vector_store %arg14[%c8_149, %c224], %301 {strides = array<i32>} : memref<32x384xf32, #tpu.memory_space<vmem>>, vector<16x32xf32>,
    %303 = tpu.iota {dimensions = array<i32: 1>} : vector<16x128xi32>
    %c16_i32_150 = arith.constant 16 : i32
    %c0_i32_151 = arith.constant 0 : i32
    %304 = arith.cmpi eq, %c16_i32_150, %c0_i32_151 : i32
    %c1_i32_152 = arith.constant 1 : i32
    %305 = arith.select %304, %c1_i32_152, %c16_i32_150 : i32
    %306 = vector.broadcast %305 : i32 to vector<16x128xi32>
    %307 = arith.remsi %303, %306 : vector<16x128xi32>
    %c0_i32_153 = arith.constant 0 : i32
    %308 = vector.broadcast %c0_i32_153 : i32 to vector<16x128xi32>
    %309 = arith.cmpi ne, %307, %308 : vector<16x128xi32>
    %c0_i32_154 = arith.constant 0 : i32
    %310 = vector.broadcast %c0_i32_154 : i32 to vector<16x128xi32>
    %311 = arith.cmpi slt, %307, %310 : vector<16x128xi32>
    %c0_i32_155 = arith.constant 0 : i32
    %312 = arith.cmpi slt, %305, %c0_i32_155 : i32
    %313 = vector.broadcast %312 : i1 to vector<16x128xi1>
    %314 = vector.broadcast %313 : vector<16x128xi1> to vector<16x128xi1>
    %315 = arith.xori %311, %314 : vector<16x128xi1>
    %316 = arith.andi %315, %309 : vector<16x128xi1>
    %317 = vector.broadcast %305 : i32 to vector<16x128xi32>
    %318 = arith.addi %307, %317 : vector<16x128xi32>
    %319 = arith.select %316, %318, %307 : vector<16x128xi1>, vector<16x128xi32>
    %c0_i32_156 = arith.constant 0 : i32
    %320 = vector.broadcast %c0_i32_156 : i32 to vector<16x128xi32>
    %321 = arith.cmpi eq, %319, %320 : vector<16x128xi32>
    %c15_i32_157 = arith.constant 15 : i32
    %322 = vector.broadcast %c15_i32_157 : i32 to vector<16x128xi32>
    %323 = arith.cmpi eq, %319, %322 : vector<16x128xi32>
    %cst_158 = arith.constant 0.000000e+00 : f32
    %324 = vector.broadcast %cst_158 : f32 to vector<16x128xf32>
    %c7_159 = arith.constant 7 : index
    %c127_160 = arith.constant 127 : index
    %325 = vector.load %arg14[%c7_159, %c127_160] : memref<32x384xf32, #tpu.memory_space<vmem>>, vector<16x128xf32>
    %cst_161 = arith.constant 0.000000e+00 : f32
    %326 = vector.broadcast %cst_161 : f32 to vector<16x128xf32>
    %327 = arith.select %321, %326, %325 : vector<16x128xi1>, vector<16x128xf32>
    %c0_162 = arith.constant 0 : index
    %c0_163 = arith.constant 0 : index
    %328 = vector.load %arg4[%c0_162, %c0_163] : memref<9x128xf32, #tpu.memory_space<vmem>>, vector<1x128xf32>
    %329 = vector.broadcast %328 : vector<1x128xf32> to vector<16x128xf32>
    %330 = arith.mulf %327, %329 : vector<16x128xf32>
    %331 = arith.addf %324, %330 : vector<16x128xf32>
    %c7_164 = arith.constant 7 : index
    %c128_165 = arith.constant 128 : index
    %332 = vector.load %arg14[%c7_164, %c128_165] : memref<32x384xf32, #tpu.memory_space<vmem>>, vector<16x128xf32>
    %c1_166 = arith.constant 1 : index
    %c0_167 = arith.constant 0 : index
    %333 = vector.load %arg4[%c1_166, %c0_167] : memref<9x128xf32, #tpu.memory_space<vmem>>, vector<1x128xf32>
    %334 = vector.broadcast %333 : vector<1x128xf32> to vector<16x128xf32>
    %335 = arith.mulf %332, %334 : vector<16x128xf32>
    %336 = arith.addf %331, %335 : vector<16x128xf32>
    %c7_168 = arith.constant 7 : index
    %c129_169 = arith.constant 129 : index
    %337 = vector.load %arg14[%c7_168, %c129_169] : memref<32x384xf32, #tpu.memory_space<vmem>>, vector<16x128xf32>
    %cst_170 = arith.constant 0.000000e+00 : f32
    %338 = vector.broadcast %cst_170 : f32 to vector<16x128xf32>
    %339 = arith.select %323, %338, %337 : vector<16x128xi1>, vector<16x128xf32>
    %c2_171 = arith.constant 2 : index
    %c0_172 = arith.constant 0 : index
    %340 = vector.load %arg4[%c2_171, %c0_172] : memref<9x128xf32, #tpu.memory_space<vmem>>, vector<1x128xf32>
    %341 = vector.broadcast %340 : vector<1x128xf32> to vector<16x128xf32>
    %342 = arith.mulf %339, %341 : vector<16x128xf32>
    %343 = arith.addf %336, %342 : vector<16x128xf32>
    %c8_173 = arith.constant 8 : index
    %c127_174 = arith.constant 127 : index
    %344 = vector.load %arg14[%c8_173, %c127_174] : memref<32x384xf32, #tpu.memory_space<vmem>>, vector<16x128xf32>
    %cst_175 = arith.constant 0.000000e+00 : f32
    %345 = vector.broadcast %cst_175 : f32 to vector<16x128xf32>
    %346 = arith.select %321, %345, %344 : vector<16x128xi1>, vector<16x128xf32>
    %c3_176 = arith.constant 3 : index
    %c0_177 = arith.constant 0 : index
    %347 = vector.load %arg4[%c3_176, %c0_177] : memref<9x128xf32, #tpu.memory_space<vmem>>, vector<1x128xf32>
    %348 = vector.broadcast %347 : vector<1x128xf32> to vector<16x128xf32>
    %349 = arith.mulf %346, %348 : vector<16x128xf32>
    %350 = arith.addf %343, %349 : vector<16x128xf32>
    %c8_178 = arith.constant 8 : index
    %c128_179 = arith.constant 128 : index
    %351 = vector.load %arg14[%c8_178, %c128_179] : memref<32x384xf32, #tpu.memory_space<vmem>>, vector<16x128xf32>
    %c4_180 = arith.constant 4 : index
    %c0_181 = arith.constant 0 : index
    %352 = vector.load %arg4[%c4_180, %c0_181] : memref<9x128xf32, #tpu.memory_space<vmem>>, vector<1x128xf32>
    %353 = vector.broadcast %352 : vector<1x128xf32> to vector<16x128xf32>
    %354 = arith.mulf %351, %353 : vector<16x128xf32>
    %355 = arith.addf %350, %354 : vector<16x128xf32>
    %c8_182 = arith.constant 8 : index
    %c129_183 = arith.constant 129 : index
    %356 = vector.load %arg14[%c8_182, %c129_183] : memref<32x384xf32, #tpu.memory_space<vmem>>, vector<16x128xf32>
    %cst_184 = arith.constant 0.000000e+00 : f32
    %357 = vector.broadcast %cst_184 : f32 to vector<16x128xf32>
    %358 = arith.select %323, %357, %356 : vector<16x128xi1>, vector<16x128xf32>
    %c5_185 = arith.constant 5 : index
    %c0_186 = arith.constant 0 : index
    %359 = vector.load %arg4[%c5_185, %c0_186] : memref<9x128xf32, #tpu.memory_space<vmem>>, vector<1x128xf32>
    %360 = vector.broadcast %359 : vector<1x128xf32> to vector<16x128xf32>
    %361 = arith.mulf %358, %360 : vector<16x128xf32>
    %362 = arith.addf %355, %361 : vector<16x128xf32>
    %c9_187 = arith.constant 9 : index
    %c127_188 = arith.constant 127 : index
    %363 = vector.load %arg14[%c9_187, %c127_188] : memref<32x384xf32, #tpu.memory_space<vmem>>, vector<16x128xf32>
    %cst_189 = arith.constant 0.000000e+00 : f32
    %364 = vector.broadcast %cst_189 : f32 to vector<16x128xf32>
    %365 = arith.select %321, %364, %363 : vector<16x128xi1>, vector<16x128xf32>
    %c6_190 = arith.constant 6 : index
    %c0_191 = arith.constant 0 : index
    %366 = vector.load %arg4[%c6_190, %c0_191] : memref<9x128xf32, #tpu.memory_space<vmem>>, vector<1x128xf32>
    %367 = vector.broadcast %366 : vector<1x128xf32> to vector<16x128xf32>
    %368 = arith.mulf %365, %367 : vector<16x128xf32>
    %369 = arith.addf %362, %368 : vector<16x128xf32>
    %c9_192 = arith.constant 9 : index
    %c128_193 = arith.constant 128 : index
    %370 = vector.load %arg14[%c9_192, %c128_193] : memref<32x384xf32, #tpu.memory_space<vmem>>, vector<16x128xf32>
    %c7_194 = arith.constant 7 : index
    %c0_195 = arith.constant 0 : index
    %371 = vector.load %arg4[%c7_194, %c0_195] : memref<9x128xf32, #tpu.memory_space<vmem>>, vector<1x128xf32>
    %372 = vector.broadcast %371 : vector<1x128xf32> to vector<16x128xf32>
    %373 = arith.mulf %370, %372 : vector<16x128xf32>
    %374 = arith.addf %369, %373 : vector<16x128xf32>
    %c9_196 = arith.constant 9 : index
    %c129_197 = arith.constant 129 : index
    %375 = vector.load %arg14[%c9_196, %c129_197] : memref<32x384xf32, #tpu.memory_space<vmem>>, vector<16x128xf32>
    %cst_198 = arith.constant 0.000000e+00 : f32
    %376 = vector.broadcast %cst_198 : f32 to vector<16x128xf32>
    %377 = arith.select %323, %376, %375 : vector<16x128xi1>, vector<16x128xf32>
    %c8_199 = arith.constant 8 : index
    %c0_200 = arith.constant 0 : index
    %378 = vector.load %arg4[%c8_199, %c0_200] : memref<9x128xf32, #tpu.memory_space<vmem>>, vector<1x128xf32>
    %379 = vector.broadcast %378 : vector<1x128xf32> to vector<16x128xf32>
    %380 = arith.mulf %377, %379 : vector<16x128xf32>
    %381 = arith.addf %374, %380 : vector<16x128xf32>
    %c0_201 = arith.constant 0 : index
    %c0_202 = arith.constant 0 : index
    %382 = vector.load %arg5[%c0_201, %c0_202] : memref<1x128xf32, #tpu.memory_space<vmem>>, vector<1x128xf32>
    %383 = vector.broadcast %382 : vector<1x128xf32> to vector<16x128xf32>
    %384 = arith.mulf %381, %383 : vector<16x128xf32>
    %c0_203 = arith.constant 0 : index
    %c0_204 = arith.constant 0 : index
    %385 = vector.load %arg6[%c0_203, %c0_204] : memref<1x128xf32, #tpu.memory_space<vmem>>, vector<1x128xf32>
    %386 = vector.broadcast %385 : vector<1x128xf32> to vector<16x128xf32>
    %387 = arith.addf %384, %386 : vector<16x128xf32>
    %388 = arith.addf %387, %2 : vector<16x128xf32>
    %cst_205 = arith.constant 0.000000e+00 : f32
    %389 = vector.broadcast %cst_205 : f32 to vector<16x128xf32>
    %390 = arith.maximumf %388, %389 : vector<16x128xf32>
    %c0_206 = arith.constant 0 : index
    %c0_207 = arith.constant 0 : index
    %391 = vector.load %arg13[%c0_206, %c0_207] : memref<16x128xf32, #tpu.memory_space<vmem>>, vector<16x128xf32>
    tpu.vector_store %arg13[%c0_206, %c0_207], %390 {strides = array<i32>} : memref<16x128xf32, #tpu.memory_space<vmem>>, vector<16x128xf32>,
    return
  }
}

</mosaic_0001>

<llo_original>
// kernel: tpu_custom_call.1
$region0: #{tpu_custom_call.1}
  #allocation0 [shape = 'u32[]', space=smem, size = 0x4, offset = 0x4, fixed_abs, tag = 'smem constant byte address 0x4 - core index']
  #allocation1 [shape = 'u32[144,128]{1,0:T(1,128)}', space=vmem, size = 0x12000, scoped, tag = 'internal scratch']
  #allocation2 [shape = 'f32[32,384]{1,0:T(8,128)}', space=vmem, size = 0xc000, scoped, tag = 'scratch operand']
  #allocation3 [shape = 'f32[1]{0:T(128)S(6)}', space=smem, size = 0x200, scoped, tag = 'scoped memory for tpu_custom_call.1']
  #allocation4 [shape = 'f32[1]{0:T(128)S(6)}', space=smem, size = 0x200, scoped, tag = 'scoped memory for tpu_custom_call.1']
  %s0 = inlined_call_operand.hbm [shape: f32[16,128], index: 0, kind: input, shape index: {}]
  %s1 = inlined_call_operand.hbm [shape: f32[9,32], index: 1, kind: input, shape index: {}]
  %s2 = inlined_call_operand.vmem [shape: f32[1,32], index: 2, kind: input, shape index: {}]
  %s3 = inlined_call_operand.vmem [shape: f32[1,32], index: 3, kind: input, shape index: {}]
  %s4 = inlined_call_operand.vmem [shape: f32[9,128], index: 4, kind: input, shape index: {}]
  %s5 = inlined_call_operand.hbm [shape: f32[1,128], index: 5, kind: input, shape index: {}]
  %s6 = inlined_call_operand.hbm [shape: f32[1,128], index: 6, kind: input, shape index: {}]
  %s7 = inlined_call_operand.hbm [shape: f32[1,4], index: 7, kind: input, shape index: {}]
  %s8 = inlined_call_operand.<no memory space> [shape: f32[1], index: 8, kind: input, shape index: {}]
  %s9 = inlined_call_operand.<no memory space> [shape: f32[1], index: 9, kind: input, shape index: {}]
  %s10 = inlined_call_operand.vmem [shape: f32[9,9], index: 10, kind: input, shape index: {}]
  %s11 = inlined_call_operand.vmem [shape: f32[9], index: 11, kind: input, shape index: {}]
  %s12 = inlined_call_operand.vmem [shape: f32[9], index: 12, kind: input, shape index: {}]
  %s13 = inlined_call_operand.hbm [shape: f32[16,128], index: 13, kind: output, shape index: {}]
  %s14 = sld [smem:[#allocation0]]
  $region94: #{tpu_custom_call.1} parent=0
    _
  %s16 = ssub.s32 1, %s14
  %s17 = scalar_select 0, %s16, %s14
  %18 = sst [smem:[#allocation3]] %s8
  %19 = sst [smem:[#allocation4]] %s9
  $region1: #{tpu_custom_call.1} parent=0
    #allocation5 [shape = 'u8[8192]{0}', space=vmem, size = 0x2000, scoped, tag = 'input window, operand 0, single buffered']
    #allocation6 [shape = 's32[1]{0}', space=sflag, size = 0x4, scoped, tag = 'scoped memory for tpu_custom_call.1']
    #allocation7 [shape = 's32[1]{0}', space=sflag, size = 0x4, scoped, tag = 'scoped memory for tpu_custom_call.1']
    #allocation8 [shape = 's32[1]{0}', space=sflag, size = 0x4, scoped, tag = 'scoped memory for tpu_custom_call.1']
    #allocation9 [shape = 's32[1]{0}', space=sflag, size = 0x4, scoped, tag = 'scoped memory for tpu_custom_call.1']
    #allocation10 [shape = 'u8[8192]{0}', space=vmem, size = 0x2000, scoped, tag = 'input window, operand 1, single buffered']
    #allocation11 [shape = 's32[1]{0}', space=sflag, size = 0x4, scoped, tag = 'scoped memory for tpu_custom_call.1']
    #allocation12 [shape = 'u8[512]{0}', space=vmem, size = 0x400, scoped, tag = 'input window, operand 5, single buffered']
    #allocation13 [shape = 'u8[512]{0}', space=vmem, size = 0x400, scoped, tag = 'input window, operand 6, single buffered']
    #allocation14 [shape = 's32[1]{0}', space=sflag, size = 0x4, scoped, tag = 'scoped memory for tpu_custom_call.1']
    #allocation15 [shape = 'u8[512]{0}', space=smem, size = 0x200, scoped, tag = 'input window, operand 7, single buffered']
    #allocation16 [shape = 'u8[8192]{0}', space=smem, size = 0x2000, scoped, tag = 'input window, operand 10, single buffered']
    #allocation17 [shape = 'u8[512]{0}', space=smem, size = 0x200, scoped, tag = 'input window, operand 11, single buffered']
    #allocation18 [shape = 's32[1]{0}', space=sflag, size = 0x4, scoped, tag = 'scoped memory for tpu_custom_call.1']
    #allocation19 [shape = 'u8[512]{0}', space=smem, size = 0x200, scoped, tag = 'input window, operand 12, single buffered']
    #allocation20 [shape = 'u8[8192]{0}', space=vmem, size = 0x2000, scoped, tag = 'output window, operand 0, single buffered']
    %20 = vsyncpa [#allocation6], 0
    %21 = vsyncpa [#allocation11], 0
    %22 = vsyncpa [#allocation14], 0
    %23 = vsyncpa [#allocation8], 0
    %24 = vsyncpa [#allocation9], 0
    %25 = vsyncpa [#allocation18], 0
    %26 = vsyncpa [#allocation7], 0
    // Predicated region
    $region2: #{tpu_custom_call.1} parent=1 // pred_check
      _
    $region3: #{tpu_custom_call.1} parent=1 // pred_check_branch
      %28 = sbr.rel (0) target = $region5
    $region4: #{tpu_custom_call.1} parent=1 // pred_region
      %s30 = ssub.s32 256, 256
      %31 = vsyncadd [#allocation6], %s30
      %s32 = sshll.u32 [#allocation5], 4
      %s33 = int_to_ptr.vmem [resolvable:$true] %s32
      %38 = dma.hbm_to_vmem [thread:$0]  %s0, 256, %s33, [#allocation6], 128, 128, 8
    $region5: #{tpu_custom_call.1} parent=1 // pred_fallthru
      _
    // Predicated region
    $region6: #{tpu_custom_call.1} parent=1 // pred_check
      _
    $region7: #{tpu_custom_call.1} parent=1 // pred_check_branch
      %40 = sbr.rel (0) target = $region9
    $region8: #{tpu_custom_call.1} parent=1 // pred_region
      %s42 = ssub.s32 256, 256
      %43 = vsyncadd [#allocation11], %s42
      %s44 = sshll.u32 [#allocation10], 4
      %s45 = int_to_ptr.vmem [resolvable:$true] %s44
      %50 = dma.hbm_to_vmem [thread:$0]  %s1, 256, %s45, [#allocation11], 128, 128, 8
    $region9: #{tpu_custom_call.1} parent=1 // pred_fallthru
      _
    // Predicated region
    $region10: #{tpu_custom_call.1} parent=1 // pred_check
      _
    $region11: #{tpu_custom_call.1} parent=1 // pred_check_branch
      %52 = sbr.rel (0) target = $region13
    $region12: #{tpu_custom_call.1} parent=1 // pred_region
      _
    $region13: #{tpu_custom_call.1} parent=1 // pred_fallthru
      _
    // Predicated region
    $region14: #{tpu_custom_call.1} parent=1 // pred_check
      _
    $region15: #{tpu_custom_call.1} parent=1 // pred_check_branch
      %54 = sbr.rel (0) target = $region17
    $region16: #{tpu_custom_call.1} parent=1 // pred_region
      _
    $region17: #{tpu_custom_call.1} parent=1 // pred_fallthru
      _
    // Predicated region
    $region18: #{tpu_custom_call.1} parent=1 // pred_check
      _
    $region19: #{tpu_custom_call.1} parent=1 // pred_check_branch
      %56 = sbr.rel (0) target = $region21
    $region20: #{tpu_custom_call.1} parent=1 // pred_region
      _
    $region21: #{tpu_custom_call.1} parent=1 // pred_fallthru
      _
    // Predicated region
    $region22: #{tpu_custom_call.1} parent=1 // pred_check
      _
    $region23: #{tpu_custom_call.1} parent=1 // pred_check_branch
      %58 = sbr.rel (0) target = $region25
    $region24: #{tpu_custom_call.1} parent=1 // pred_region
      %s60 = ssub.s32 16, 16
      %61 = vsyncadd [#allocation11], %s60
      %s63 = sshll.u32 [#allocation12], 4
      %s64 = int_to_ptr.vmem [resolvable:$true] %s63
      %66 = dma.hbm_to_vmem [thread:$0]  %s5, 16, %s64, [#allocation11]
    $region25: #{tpu_custom_call.1} parent=1 // pred_fallthru
      _
    // Predicated region
    $region26: #{tpu_custom_call.1} parent=1 // pred_check
      _
    $region27: #{tpu_custom_call.1} parent=1 // pred_check_branch
      %68 = sbr.rel (0) target = $region29
    $region28: #{tpu_custom_call.1} parent=1 // pred_region
      %s70 = ssub.s32 16, 16
      %71 = vsyncadd [#allocation14], %s70
      %s73 = sshll.u32 [#allocation13], 4
      %s74 = int_to_ptr.vmem [resolvable:$true] %s73
      %76 = dma.hbm_to_vmem [thread:$0]  %s6, 16, %s74, [#allocation14]
    $region29: #{tpu_custom_call.1} parent=1 // pred_fallthru
      _
    // Predicated region
    $region30: #{tpu_custom_call.1} parent=1 // pred_check
      _
    $region31: #{tpu_custom_call.1} parent=1 // pred_check_branch
      %78 = sbr.rel (0) target = $region33
    $region32: #{tpu_custom_call.1} parent=1 // pred_region
      %s80 = ssub.s32 16, 16
      %81 = vsyncadd [#allocation8], %s80
      %84 = dma.hbm_to_smem %s7, 16, [#allocation15], [#allocation8]
    $region33: #{tpu_custom_call.1} parent=1 // pred_fallthru
      _
    // Predicated region
    $region34: #{tpu_custom_call.1} parent=1 // pred_check
      _
    $region35: #{tpu_custom_call.1} parent=1 // pred_check_branch
      %86 = sbr.rel (0) target = $region37
    $region36: #{tpu_custom_call.1} parent=1 // pred_region
      _
    $region37: #{tpu_custom_call.1} parent=1 // pred_fallthru
      _
    // Predicated region
    $region38: #{tpu_custom_call.1} parent=1 // pred_check
      _
    $region39: #{tpu_custom_call.1} parent=1 // pred_check_branch
      %88 = sbr.rel (0) target = $region41
    $region40: #{tpu_custom_call.1} parent=1 // pred_region
      _
    $region41: #{tpu_custom_call.1} parent=1 // pred_fallthru
      _
    // Predicated region
    $region42: #{tpu_custom_call.1} parent=1 // pred_check
      _
    $region43: #{tpu_custom_call.1} parent=1 // pred_check_branch
      %90 = sbr.rel (0) target = $region45
    $region44: #{tpu_custom_call.1} parent=1 // pred_region
      %s92 = ssub.s32 256, 256
      %93 = vsyncadd [#allocation9], %s92
      %s94 = sshll.u32 %s10, 4
      %s95 = int_to_ptr.vmem [resolvable:$true] %s94
      %100 = dma.vmem_to_smem %s95, 256, [#allocation16], [#allocation9], 128, 128, 8
    $region45: #{tpu_custom_call.1} parent=1 // pred_fallthru
      _
    // Predicated region
    $region46: #{tpu_custom_call.1} parent=1 // pred_check
      _
    $region47: #{tpu_custom_call.1} parent=1 // pred_check_branch
      %102 = sbr.rel (0) target = $region49
    $region48: #{tpu_custom_call.1} parent=1 // pred_region
      %s104 = ssub.s32 16, 16
      %105 = vsyncadd [#allocation18], %s104
      %s107 = sshll.u32 %s11, 4
      %s108 = int_to_ptr.vmem [resolvable:$true] %s107
      %110 = dma.vmem_to_smem %s108, 16, [#allocation17], [#allocation18]
    $region49: #{tpu_custom_call.1} parent=1 // pred_fallthru
      _
    // Predicated region
    $region50: #{tpu_custom_call.1} parent=1 // pred_check
      _
    $region51: #{tpu_custom_call.1} parent=1 // pred_check_branch
      %112 = sbr.rel (0) target = $region53
    $region52: #{tpu_custom_call.1} parent=1 // pred_region
      %s114 = ssub.s32 16, 16
      %115 = vsyncadd [#allocation18], %s114
      %s117 = sshll.u32 %s12, 4
      %s118 = int_to_ptr.vmem [resolvable:$true] %s117
      %120 = dma.vmem_to_smem %s118, 16, [#allocation19], [#allocation18]
    $region53: #{tpu_custom_call.1} parent=1 // pred_fallthru
      _
    // Predicated region
    $region54: #{tpu_custom_call.1} parent=1 // pred_check
      _
    $region55: #{tpu_custom_call.1} parent=1 // pred_check_branch
      %122 = sbr.rel (0) target = $region57
    $region56: #{tpu_custom_call.1} parent=1 // pred_region
      %123 = dma.done [#allocation6], 256
    $region57: #{tpu_custom_call.1} parent=1 // pred_fallthru
      _
    // Predicated region
    $region58: #{tpu_custom_call.1} parent=1 // pred_check
      _
    $region59: #{tpu_custom_call.1} parent=1 // pred_check_branch
      %125 = sbr.rel (0) target = $region61
    $region60: #{tpu_custom_call.1} parent=1 // pred_region
      %126 = dma.done [#allocation11], 256
    $region61: #{tpu_custom_call.1} parent=1 // pred_fallthru
      _
    // Predicated region
    $region62: #{tpu_custom_call.1} parent=1 // pred_check
      _
    $region63: #{tpu_custom_call.1} parent=1 // pred_check_branch
      %128 = sbr.rel (0) target = $region65
    $region64: #{tpu_custom_call.1} parent=1 // pred_region
      %129 = dma.done [#allocation11], 16
    $region65: #{tpu_custom_call.1} parent=1 // pred_fallthru
      _
    // Predicated region
    $region66: #{tpu_custom_call.1} parent=1 // pred_check
      _
    $region67: #{tpu_custom_call.1} parent=1 // pred_check_branch
      %131 = sbr.rel (0) target = $region69
    $region68: #{tpu_custom_call.1} parent=1 // pred_region
      %132 = dma.done [#allocation14], 16
    $region69: #{tpu_custom_call.1} parent=1 // pred_fallthru
      _
    // Predicated region
    $region70: #{tpu_custom_call.1} parent=1 // pred_check
      _
    $region71: #{tpu_custom_call.1} parent=1 // pred_check_branch
      %134 = sbr.rel (0) target = $region73
    $region72: #{tpu_custom_call.1} parent=1 // pred_region
      %135 = dma.done [#allocation8], 16
    $region73: #{tpu_custom_call.1} parent=1 // pred_fallthru
      _
    // Predicated region
    $region74: #{tpu_custom_call.1} parent=1 // pred_check
      _
    $region75: #{tpu_custom_call.1} parent=1 // pred_check_branch
      %137 = sbr.rel (0) target = $region77
    $region76: #{tpu_custom_call.1} parent=1 // pred_region
      %138 = dma.done [#allocation9], 256
    $region77: #{tpu_custom_call.1} parent=1 // pred_fallthru
      _
    // Predicated region
    $region78: #{tpu_custom_call.1} parent=1 // pred_check
      _
    $region79: #{tpu_custom_call.1} parent=1 // pred_check_branch
      %140 = sbr.rel (0) target = $region81
    $region80: #{tpu_custom_call.1} parent=1 // pred_region
      %141 = dma.done [#allocation18], 16
    $region81: #{tpu_custom_call.1} parent=1 // pred_fallthru
      _
    // Predicated region
    $region82: #{tpu_custom_call.1} parent=1 // pred_check
      _
    $region83: #{tpu_custom_call.1} parent=1 // pred_check_branch
      %143 = sbr.rel (0) target = $region85
    $region84: #{tpu_custom_call.1} parent=1 // pred_region
      %144 = dma.done [#allocation18], 16
    $region85: #{tpu_custom_call.1} parent=1 // pred_fallthru
      _
    %145 = sfence
    %146 = vst [vmem:[#allocation2] sm:$0xff] 0.0
    %147 = vst [vmem:[#allocation2 + $0x8] sm:$0xff] 0.0
    %148 = vst [vmem:[#allocation2 + $0x10] sm:$0xff] 0.0
    %149 = vst [vmem:[#allocation2 + $0x18] sm:$0xff] 0.0
    %150 = vst [vmem:[#allocation2 + $0x20] sm:$0xff] 0.0
    %151 = vst [vmem:[#allocation2 + $0x28] sm:$0xff] 0.0
    %152 = vst [vmem:[#allocation2 + $0x30] sm:$0xff] 0.0
    %153 = vst [vmem:[#allocation2 + $0x38] sm:$0xff] 0.0
    %154 = vst [vmem:[#allocation2 + $0x40] sm:$0xff] 0.0
    %155 = vst [vmem:[#allocation2 + $0x48] sm:$0xff] 0.0
    %156 = vst [vmem:[#allocation2 + $0x50] sm:$0xff] 0.0
    %157 = vst [vmem:[#allocation2 + $0x58] sm:$0xff] 0.0
    %v158 = vld [vmem:[#allocation5] sm:$0xff]
    %v159 = vld [vmem:[#allocation5 + $0x8] sm:$0xff]
    %s160 = sld [smem:[#allocation15]]
    %v161 = vstv %s160
    %v162 = vmul.f32 %v161, %v158
    %v163 = vmul.f32 %v161, %v159
    %v164 = vadd.f32 %v162, 0.0
    %v165 = vadd.f32 %v163, 0.0
    %s166 = sld [smem:[#allocation15 + $0x1]]
    %v167 = vstv %s166
    %v168 = vmul.f32 %v167, %v158
    %v169 = vmul.f32 %v167, %v159
    %172 = vrot.lane.b32.xlu0 %v168, 96
    %v173 = vpop.permute.xlu0 %172
    %174 = vrot.lane.b32.xlu0 %v169, 96
    %v175 = vpop.permute.xlu0 %174
    %v178 = vadd.f32 %v164, %v173
    %v179 = vadd.f32 %v165, %v175
    %s180 = sld [smem:[#allocation15 + $0x2]]
    %v181 = vstv %s180
    %v182 = vmul.f32 %v181, %v158
    %v183 = vmul.f32 %v181, %v159
    %186 = vrot.lane.b32.xlu0 %v182, 64
    %v187 = vpop.permute.xlu0 %186
    %188 = vrot.lane.b32.xlu0 %v183, 64
    %v189 = vpop.permute.xlu0 %188
    %v192 = vadd.f32 %v178, %v187
    %v193 = vadd.f32 %v179, %v189
    %s194 = sld [smem:[#allocation15 + $0x3]]
    %v195 = vstv %s194
    %v196 = vmul.f32 %v195, %v158
    %v197 = vmul.f32 %v195, %v159
    %200 = vrot.lane.b32.xlu0 %v196, 32
    %v201 = vpop.permute.xlu0 %200
    %202 = vrot.lane.b32.xlu0 %v197, 32
    %v203 = vpop.permute.xlu0 %202
    %v206 = vadd.f32 %v192, %v201
    %v207 = vadd.f32 %v193, %v203
    %s208 = sld [smem:[#allocation3]]
    %v209 = vstv %s208
    %v210 = vmul.f32 %v206, %v209
    %v211 = vmul.f32 %v207, %v209
    %s212 = sld [smem:[#allocation4]]
    %v213 = vstv %s212
    %v214 = vadd.f32 %v210, %v213
    %v215 = vadd.f32 %v211, %v213
    %vm216 = vcmask 261120
    %217 = vst.msk [vmem:[#allocation2 + $0x20] sm:$0xff] %vm216, %v214
    %218 = vst.msk [vmem:[#allocation2 + $0x38] sm:$0xff] %vm216, %v215
    %v219 = vlaneseq
    %v220 = vand.u32 %v219, 127
    %vm221 = vcmp.lt.s32.totalorder %v220, 0
    %v222 = vsub.s32 0, %v220
    %v223 = vsel %vm221, %v222, %v220
    %v224 = vshrl.u32 %v223, 4
    %v225 = vand.u32 %v223, 15
    %v226 = vsub.s32 0, %v225
    %v227 = vsel %vm221, %v226, %v225
    %vm228 = vcmp.ne.s32.totalorder %v227, 0
    %vm229 = vcmp.lt.s32.totalorder %v227, 0
    %vm230 = vmand %vm229, %vm228
    %v231 = vadd.s32 %v227, 16
    %v232 = vsel %vm230, %v231, %v227
    %vm233 = vcmp.eq.s32.totalorder %v232, 0
    %vm234 = vcmp.eq.s32.totalorder %v232, 15
    %v235 = vld [vmem:[#allocation2] sm:$0x80]
    %v236 = vld [vmem:[#allocation2 + $0x8] sm:$0x80]
    %v237 = vld [vmem:[#allocation2 + $0x18] sm:$0xff]
    %v238 = vld [vmem:[#allocation2 + $0x20] sm:$0xff]
    %v239 = vld [vmem:[#allocation2 + $0x30] sm:$0x7f]
    %v240 = vld [vmem:[#allocation2 + $0x38] sm:$0x7f]
    %vm247 = vcmask 1040384
    %v248 = vrot.slane %v235, 7
    %v249 = vrot.slane %v237, 7
    %v250 = vsel %vm247, %v248, %v249
    %v251 = vrot.slane %v236, 7
    %v252 = vrot.slane %v238, 7
    %v253 = vsel %vm247, %v251, %v252
    %v254 = vrot.slane %v239, 7
    %v255 = vsel %vm247, %v249, %v254
    %v256 = vrot.slane %v240, 7
    %v257 = vsel %vm247, %v252, %v256
    %258 = vrot.lane.b32.xlu0 %v250, 1
    %v259 = vpop.permute.xlu0 %258
    %260 = vrot.lane.b32.xlu0 %v253, 1
    %v261 = vpop.permute.xlu0 %260
    %262 = vrot.lane.b32.xlu0 %v255, 1
    %v263 = vpop.permute.xlu0 %262
    %264 = vrot.lane.b32.xlu0 %v257, 1
    %v265 = vpop.permute.xlu0 %264
    %vm266 = vcmask 7168
    %v267 = vsel %vm266, %v259, %v261
    %v268 = vsel %vm266, %v263, %v265
    %v271 = vsel %vm233, 0.0, %v267
    %v272 = vsel %vm233, 0.0, %v268
    %v273 = vld [vmem:[#allocation10] sm:$0x1]
    %v274 = vlaneseq
    %v275 = vshrl.u32 %v274, 7
    %v276 = vsub.s32 0, %v275
    %v277 = vrot.slane %v273, %v276
    %v278 = vmul.f32 %v271, %v277
    %v279 = vmul.f32 %v272, %v277
    %v280 = vadd.f32 %v278, 0.0
    %v281 = vadd.f32 %v279, 0.0
    %v282 = vld [vmem:[#allocation10 + $0x1] sm:$0x1]
    %v283 = vlaneseq
    %v284 = vshrl.u32 %v283, 7
    %v285 = vsub.s32 0, %v284
    %v286 = vrot.slane %v282, %v285
    %v287 = vmul.f32 %v236, %v286
    %v288 = vmul.f32 %v238, %v286
    %v289 = vmul.f32 %v240, %v286
    %v293 = vrot.slane %v287, 7
    %v294 = vrot.slane %v288, 7
    %v295 = vsel %vm247, %v293, %v294
    %v296 = vrot.slane %v289, 7
    %v297 = vsel %vm247, %v294, %v296
    %v300 = vadd.f32 %v280, %v295
    %v301 = vadd.f32 %v281, %v297
    %302 = vrot.lane.b32.xlu0 %v253, 127
    %v303 = vpop.permute.xlu0 %302
    %304 = vrot.lane.b32.xlu0 %v257, 127
    %v305 = vpop.permute.xlu0 %304
    %v308 = vsel %vm234, 0.0, %v303
    %v309 = vsel %vm234, 0.0, %v305
    %v310 = vld [vmem:[#allocation10 + $0x2] sm:$0x1]
    %v311 = vlaneseq
    %v312 = vshrl.u32 %v311, 7
    %v313 = vsub.s32 0, %v312
    %v314 = vrot.slane %v310, %v313
    %v315 = vmul.f32 %v308, %v314
    %v316 = vmul.f32 %v309, %v314
    %v317 = vadd.f32 %v300, %v315
    %v318 = vadd.f32 %v301, %v316
    %v319 = vld [vmem:[#allocation2 + $0x30] sm:$0xff]
    %v320 = vld [vmem:[#allocation2 + $0x38] sm:$0xff]
    %323 = vrot.lane.b32.xlu0 %v237, 1
    %v324 = vpop.permute.xlu0 %323
    %325 = vrot.lane.b32.xlu0 %v238, 1
    %v326 = vpop.permute.xlu0 %325
    %327 = vrot.lane.b32.xlu0 %v319, 1
    %v328 = vpop.permute.xlu0 %327
    %329 = vrot.lane.b32.xlu0 %v320, 1
    %v330 = vpop.permute.xlu0 %329
    %v331 = vsel %vm266, %v324, %v326
    %v332 = vsel %vm266, %v328, %v330
    %v335 = vsel %vm233, 0.0, %v331
    %v336 = vsel %vm233, 0.0, %v332
    %v337 = vld [vmem:[#allocation10 + $0x3] sm:$0x1]
    %v338 = vlaneseq
    %v339 = vshrl.u32 %v338, 7
    %v340 = vsub.s32 0, %v339
    %v341 = vrot.slane %v337, %v340
    %v342 = vmul.f32 %v335, %v341
    %v343 = vmul.f32 %v336, %v341
    %v344 = vadd.f32 %v317, %v342
    %v345 = vadd.f32 %v318, %v343
    %v346 = vld [vmem:[#allocation10 + $0x4] sm:$0x1]
    %v347 = vlaneseq
    %v348 = vshrl.u32 %v347, 7
    %v349 = vsub.s32 0, %v348
    %v350 = vrot.slane %v346, %v349
    %v351 = vmul.f32 %v238, %v350
    %v352 = vmul.f32 %v320, %v350
    %v353 = vadd.f32 %v344, %v351
    %v354 = vadd.f32 %v345, %v352
    %355 = vrot.lane.b32.xlu0 %v238, 127
    %v356 = vpop.permute.xlu0 %355
    %357 = vrot.lane.b32.xlu0 %v320, 127
    %v358 = vpop.permute.xlu0 %357
    %v361 = vsel %vm234, 0.0, %v356
    %v362 = vsel %vm234, 0.0, %v358
    %v363 = vld [vmem:[#allocation10 + $0x5] sm:$0x1]
    %v364 = vlaneseq
    %v365 = vshrl.u32 %v364, 7
    %v366 = vsub.s32 0, %v365
    %v367 = vrot.slane %v363, %v366
    %v368 = vmul.f32 %v361, %v367
    %v369 = vmul.f32 %v362, %v367
    %v370 = vadd.f32 %v353, %v368
    %v371 = vadd.f32 %v354, %v369
    %v372 = vld [vmem:[#allocation2 + $0x18] sm:$0xfe]
    %v373 = vld [vmem:[#allocation2 + $0x20] sm:$0xfe]
    %v374 = vld [vmem:[#allocation2 + $0x48] sm:$0x1]
    %v375 = vld [vmem:[#allocation2 + $0x50] sm:$0x1]
    %vm380 = vcmask 1046528
    %v381 = vrot.slane %v372, 1
    %v382 = vrot.slane %v319, 1
    %v383 = vsel %vm380, %v381, %v382
    %v384 = vrot.slane %v373, 1
    %v385 = vrot.slane %v320, 1
    %v386 = vsel %vm380, %v384, %v385
    %v387 = vrot.slane %v374, 1
    %v388 = vsel %vm380, %v382, %v387
    %v389 = vrot.slane %v375, 1
    %v390 = vsel %vm380, %v385, %v389
    %391 = vrot.lane.b32.xlu0 %v383, 1
    %v392 = vpop.permute.xlu0 %391
    %393 = vrot.lane.b32.xlu0 %v386, 1
    %v394 = vpop.permute.xlu0 %393
    %395 = vrot.lane.b32.xlu0 %v388, 1
    %v396 = vpop.permute.xlu0 %395
    %397 = vrot.lane.b32.xlu0 %v390, 1
    %v398 = vpop.permute.xlu0 %397
    %v399 = vsel %vm266, %v392, %v394
    %v400 = vsel %vm266, %v396, %v398
    %v403 = vsel %vm233, 0.0, %v399
    %v404 = vsel %vm233, 0.0, %v400
    %v405 = vld [vmem:[#allocation10 + $0x6] sm:$0x1]
    %v406 = vlaneseq
    %v407 = vshrl.u32 %v406, 7
    %v408 = vsub.s32 0, %v407
    %v409 = vrot.slane %v405, %v408
    %v410 = vmul.f32 %v403, %v409
    %v411 = vmul.f32 %v404, %v409
    %v412 = vadd.f32 %v370, %v410
    %v413 = vadd.f32 %v371, %v411
    %v414 = vld [vmem:[#allocation10 + $0x7] sm:$0x1]
    %v415 = vlaneseq
    %v416 = vshrl.u32 %v415, 7
    %v417 = vsub.s32 0, %v416
    %v418 = vrot.slane %v414, %v417
    %v419 = vmul.f32 %v373, %v418
    %v420 = vmul.f32 %v320, %v418
    %v421 = vmul.f32 %v375, %v418
    %v425 = vrot.slane %v419, 1
    %v426 = vrot.slane %v420, 1
    %v427 = vsel %vm380, %v425, %v426
    %v428 = vrot.slane %v421, 1
    %v429 = vsel %vm380, %v426, %v428
    %v432 = vadd.f32 %v412, %v427
    %v433 = vadd.f32 %v413, %v429
    %434 = vrot.lane.b32.xlu0 %v386, 127
    %v435 = vpop.permute.xlu0 %434
    %436 = vrot.lane.b32.xlu0 %v390, 127
    %v437 = vpop.permute.xlu0 %436
    %v440 = vsel %vm234, 0.0, %v435
    %v441 = vsel %vm234, 0.0, %v437
    %v442 = vld [vmem:[#allocation10 + $0x8] sm:$0x1]
    %v443 = vlaneseq
    %v444 = vshrl.u32 %v443, 7
    %v445 = vsub.s32 0, %v444
    %v446 = vrot.slane %v442, %v445
    %v447 = vmul.f32 %v440, %v446
    %v448 = vmul.f32 %v441, %v446
    %v449 = vadd.f32 %v432, %v447
    %v450 = vadd.f32 %v433, %v448
    %v451 = vld [vmem:[%s2] sm:$0x1]
    %v453 = vlaneseq
    %v454 = vshrl.u32 %v453, 7
    %v455 = vsub.s32 0, %v454
    %v456 = vrot.slane %v451, %v455
    %v458 = vmul.f32 %v449, %v456
    %v459 = vmul.f32 %v450, %v456
    %v460 = vld [vmem:[%s3] sm:$0x1]
    %v462 = vlaneseq
    %v463 = vshrl.u32 %v462, 7
    %v464 = vsub.s32 0, %v463
    %v465 = vrot.slane %v460, %v464
    %v467 = vadd.f32 %v458, %v465
    %v468 = vadd.f32 %v459, %v465
    %469 = vst.msk [vmem:[#allocation2 + $0x20] sm:$0xff] %vm216, %v467
    %470 = vst.msk [vmem:[#allocation2 + $0x38] sm:$0xff] %vm216, %v468
    %v471 = vld [vmem:[#allocation2] sm:$0x80]
    %v472 = vld [vmem:[#allocation2 + $0x8] sm:$0x80]
    %v473 = vld [vmem:[#allocation2 + $0x18] sm:$0xff]
    %v474 = vld [vmem:[#allocation2 + $0x20] sm:$0xff]
    %v475 = vld [vmem:[#allocation2 + $0x30] sm:$0x7f]
    %v476 = vld [vmem:[#allocation2 + $0x38] sm:$0x7f]
    %v483 = vrot.slane %v471, 7
    %v484 = vrot.slane %v473, 7
    %v485 = vsel %vm247, %v483, %v484
    %v486 = vrot.slane %v472, 7
    %v487 = vrot.slane %v474, 7
    %v488 = vsel %vm247, %v486, %v487
    %v489 = vrot.slane %v475, 7
    %v490 = vsel %vm247, %v484, %v489
    %v491 = vrot.slane %v476, 7
    %v492 = vsel %vm247, %v487, %v491
    %493 = vrot.lane.b32.xlu0 %v485, 1
    %v494 = vpop.permute.xlu0 %493
    %495 = vrot.lane.b32.xlu0 %v488, 1
    %v496 = vpop.permute.xlu0 %495
    %497 = vrot.lane.b32.xlu0 %v490, 1
    %v498 = vpop.permute.xlu0 %497
    %499 = vrot.lane.b32.xlu0 %v492, 1
    %v500 = vpop.permute.xlu0 %499
    %v501 = vsel %vm266, %v494, %v496
    %v502 = vsel %vm266, %v498, %v500
    %v505 = vsel %vm233, 0.0, %v501
    %v506 = vsel %vm233, 0.0, %v502
    %s507 = sld [smem:[#allocation16]]
    %v508 = vstv %s507
    %v509 = vsub.f32 %v505, %v508
    %v510 = vsub.f32 %v506, %v508
    %v511 = vand.u32 2147483647, %v509
    %v512 = vand.u32 2147483647, %v510
    %v513 = vsub.f32 0.0, %v511
    %v514 = vsub.f32 0.0, %v512
    %s515 = sld [smem:[#allocation16 + $0x80]]
    %v516 = vstv %s515
    %v517 = vsub.f32 %v505, %v516
    %v518 = vsub.f32 %v506, %v516
    %v519 = vand.u32 2147483647, %v517
    %v520 = vand.u32 2147483647, %v518
    %v521 = vsub.f32 0.0, %v519
    %v522 = vsub.f32 0.0, %v520
    %s523 = sld [smem:[#allocation16 + $0x100]]
    %v524 = vstv %s523
    %v525 = vsub.f32 %v505, %v524
    %v526 = vsub.f32 %v506, %v524
    %v527 = vand.u32 2147483647, %v525
    %v528 = vand.u32 2147483647, %v526
    %v529 = vsub.f32 0.0, %v527
    %v530 = vsub.f32 0.0, %v528
    %s531 = sld [smem:[#allocation16 + $0x1]]
    %v532 = vstv %s531
    %v533 = vsub.f32 %v472, %v532
    %v534 = vsub.f32 %v474, %v532
    %v535 = vsub.f32 %v476, %v532
    %v536 = vand.u32 2147483647, %v533
    %v537 = vand.u32 2147483647, %v534
    %v538 = vand.u32 2147483647, %v535
    %v542 = vrot.slane %v536, 7
    %v543 = vrot.slane %v537, 7
    %v544 = vsel %vm247, %v542, %v543
    %v545 = vrot.slane %v538, 7
    %v546 = vsel %vm247, %v543, %v545
    %v549 = vsub.f32 %v513, %v544
    %v550 = vsub.f32 %v514, %v546
    %s551 = sld [smem:[#allocation16 + $0x81]]
    %v552 = vstv %s551
    %v553 = vsub.f32 %v472, %v552
    %v554 = vsub.f32 %v474, %v552
    %v555 = vsub.f32 %v476, %v552
    %v556 = vand.u32 2147483647, %v553
    %v557 = vand.u32 2147483647, %v554
    %v558 = vand.u32 2147483647, %v555
    %v562 = vrot.slane %v556, 7
    %v563 = vrot.slane %v557, 7
    %v564 = vsel %vm247, %v562, %v563
    %v565 = vrot.slane %v558, 7
    %v566 = vsel %vm247, %v563, %v565
    %v569 = vsub.f32 %v521, %v564
    %v570 = vsub.f32 %v522, %v566
    %s571 = sld [smem:[#allocation16 + $0x101]]
    %v572 = vstv %s571
    %v573 = vsub.f32 %v472, %v572
    %v574 = vsub.f32 %v474, %v572
    %v575 = vsub.f32 %v476, %v572
    %v576 = vand.u32 2147483647, %v573
    %v577 = vand.u32 2147483647, %v574
    %v578 = vand.u32 2147483647, %v575
    %v582 = vrot.slane %v576, 7
    %v583 = vrot.slane %v577, 7
    %v584 = vsel %vm247, %v582, %v583
    %v585 = vrot.slane %v578, 7
    %v586 = vsel %vm247, %v583, %v585
    %v589 = vsub.f32 %v529, %v584
    %v590 = vsub.f32 %v530, %v586
    %591 = vrot.lane.b32.xlu0 %v488, 127
    %v592 = vpop.permute.xlu0 %591
    %593 = vrot.lane.b32.xlu0 %v492, 127
    %v594 = vpop.permute.xlu0 %593
    %v597 = vsel %vm234, 0.0, %v592
    %v598 = vsel %vm234, 0.0, %v594
    %s599 = sld [smem:[#allocation16 + $0x2]]
    %v600 = vstv %s599
    %v601 = vsub.f32 %v597, %v600
    %v602 = vsub.f32 %v598, %v600
    %v603 = vand.u32 2147483647, %v601
    %v604 = vand.u32 2147483647, %v602
    %v605 = vsub.f32 %v549, %v603
    %v606 = vsub.f32 %v550, %v604
    %s607 = sld [smem:[#allocation16 + $0x82]]
    %v608 = vstv %s607
    %v609 = vsub.f32 %v597, %v608
    %v610 = vsub.f32 %v598, %v608
    %v611 = vand.u32 2147483647, %v609
    %v612 = vand.u32 2147483647, %v610
    %v613 = vsub.f32 %v569, %v611
    %v614 = vsub.f32 %v570, %v612
    %s615 = sld [smem:[#allocation16 + $0x102]]
    %v616 = vstv %s615
    %v617 = vsub.f32 %v597, %v616
    %v618 = vsub.f32 %v598, %v616
    %v619 = vand.u32 2147483647, %v617
    %v620 = vand.u32 2147483647, %v618
    %v621 = vsub.f32 %v589, %v619
    %v622 = vsub.f32 %v590, %v620
    %v623 = vld [vmem:[#allocation2 + $0x30] sm:$0xff]
    %v624 = vld [vmem:[#allocation2 + $0x38] sm:$0xff]
    %627 = vrot.lane.b32.xlu0 %v473, 1
    %v628 = vpop.permute.xlu0 %627
    %629 = vrot.lane.b32.xlu0 %v474, 1
    %v630 = vpop.permute.xlu0 %629
    %631 = vrot.lane.b32.xlu0 %v623, 1
    %v632 = vpop.permute.xlu0 %631
    %633 = vrot.lane.b32.xlu0 %v624, 1
    %v634 = vpop.permute.xlu0 %633
    %v635 = vsel %vm266, %v628, %v630
    %v636 = vsel %vm266, %v632, %v634
    %v639 = vsel %vm233, 0.0, %v635
    %v640 = vsel %vm233, 0.0, %v636
    %s641 = sld [smem:[#allocation16 + $0x3]]
    %v642 = vstv %s641
    %v643 = vsub.f32 %v639, %v642
    %v644 = vsub.f32 %v640, %v642
    %v645 = vand.u32 2147483647, %v643
    %v646 = vand.u32 2147483647, %v644
    %v647 = vsub.f32 %v605, %v645
    %v648 = vsub.f32 %v606, %v646
    %s649 = sld [smem:[#allocation16 + $0x83]]
    %v650 = vstv %s649
    %v651 = vsub.f32 %v639, %v650
    %v652 = vsub.f32 %v640, %v650
    %v653 = vand.u32 2147483647, %v651
    %v654 = vand.u32 2147483647, %v652
    %v655 = vsub.f32 %v613, %v653
    %v656 = vsub.f32 %v614, %v654
    %s657 = sld [smem:[#allocation16 + $0x103]]
    %v658 = vstv %s657
    %v659 = vsub.f32 %v639, %v658
    %v660 = vsub.f32 %v640, %v658
    %v661 = vand.u32 2147483647, %v659
    %v662 = vand.u32 2147483647, %v660
    %v663 = vsub.f32 %v621, %v661
    %v664 = vsub.f32 %v622, %v662
    %s665 = sld [smem:[#allocation16 + $0x4]]
    %v666 = vstv %s665
    %v667 = vsub.f32 %v474, %v666
    %v668 = vsub.f32 %v624, %v666
    %v669 = vand.u32 2147483647, %v667
    %v670 = vand.u32 2147483647, %v668
    %v671 = vsub.f32 %v647, %v669
    %v672 = vsub.f32 %v648, %v670
    %s673 = sld [smem:[#allocation16 + $0x84]]
    %v674 = vstv %s673
    %v675 = vsub.f32 %v474, %v674
    %v676 = vsub.f32 %v624, %v674
    %v677 = vand.u32 2147483647, %v675
    %v678 = vand.u32 2147483647, %v676
    %v679 = vsub.f32 %v655, %v677
    %v680 = vsub.f32 %v656, %v678
    %s681 = sld [smem:[#allocation16 + $0x104]]
    %v682 = vstv %s681
    %v683 = vsub.f32 %v474, %v682
    %v684 = vsub.f32 %v624, %v682
    %v685 = vand.u32 2147483647, %v683
    %v686 = vand.u32 2147483647, %v684
    %v687 = vsub.f32 %v663, %v685
    %v688 = vsub.f32 %v664, %v686
    %689 = vrot.lane.b32.xlu0 %v474, 127
    %v690 = vpop.permute.xlu0 %689
    %691 = vrot.lane.b32.xlu0 %v624, 127
    %v692 = vpop.permute.xlu0 %691
    %v695 = vsel %vm234, 0.0, %v690
    %v696 = vsel %vm234, 0.0, %v692
    %s697 = sld [smem:[#allocation16 + $0x5]]
    %v698 = vstv %s697
    %v699 = vsub.f32 %v695, %v698
    %v700 = vsub.f32 %v696, %v698
    %v701 = vand.u32 2147483647, %v699
    %v702 = vand.u32 2147483647, %v700
    %v703 = vsub.f32 %v671, %v701
    %v704 = vsub.f32 %v672, %v702
    %s705 = sld [smem:[#allocation16 + $0x85]]
    %v706 = vstv %s705
    %v707 = vsub.f32 %v695, %v706
    %v708 = vsub.f32 %v696, %v706
    %v709 = vand.u32 2147483647, %v707
    %v710 = vand.u32 2147483647, %v708
    %v711 = vsub.f32 %v679, %v709
    %v712 = vsub.f32 %v680, %v710
    %s713 = sld [smem:[#allocation16 + $0x105]]
    %v714 = vstv %s713
    %v715 = vsub.f32 %v695, %v714
    %v716 = vsub.f32 %v696, %v714
    %v717 = vand.u32 2147483647, %v715
    %v718 = vand.u32 2147483647, %v716
    %v719 = vsub.f32 %v687, %v717
    %v720 = vsub.f32 %v688, %v718
    %v721 = vld [vmem:[#allocation2 + $0x18] sm:$0xfe]
    %v722 = vld [vmem:[#allocation2 + $0x20] sm:$0xfe]
    %v723 = vld [vmem:[#allocation2 + $0x30] sm:$0xff]
    %v724 = vld [vmem:[#allocation2 + $0x38] sm:$0xff]
    %v725 = vld [vmem:[#allocation2 + $0x48] sm:$0x1]
    %v726 = vld [vmem:[#allocation2 + $0x50] sm:$0x1]
    %v733 = vrot.slane %v721, 1
    %v734 = vrot.slane %v723, 1
    %v735 = vsel %vm380, %v733, %v734
    %v736 = vrot.slane %v722, 1
    %v737 = vrot.slane %v724, 1
    %v738 = vsel %vm380, %v736, %v737
    %v739 = vrot.slane %v725, 1
    %v740 = vsel %vm380, %v734, %v739
    %v741 = vrot.slane %v726, 1
    %v742 = vsel %vm380, %v737, %v741
    %743 = vrot.lane.b32.xlu0 %v735, 1
    %v744 = vpop.permute.xlu0 %743
    %745 = vrot.lane.b32.xlu0 %v738, 1
    %v746 = vpop.permute.xlu0 %745
    %747 = vrot.lane.b32.xlu0 %v740, 1
    %v748 = vpop.permute.xlu0 %747
    %749 = vrot.lane.b32.xlu0 %v742, 1
    %v750 = vpop.permute.xlu0 %749
    %v751 = vsel %vm266, %v744, %v746
    %v752 = vsel %vm266, %v748, %v750
    %v755 = vsel %vm233, 0.0, %v751
    %v756 = vsel %vm233, 0.0, %v752
    %s757 = sld [smem:[#allocation16 + $0x6]]
    %v758 = vstv %s757
    %v759 = vsub.f32 %v755, %v758
    %v760 = vsub.f32 %v756, %v758
    %v761 = vand.u32 2147483647, %v759
    %v762 = vand.u32 2147483647, %v760
    %v763 = vsub.f32 %v703, %v761
    %v764 = vsub.f32 %v704, %v762
    %s765 = sld [smem:[#allocation16 + $0x86]]
    %v766 = vstv %s765
    %v767 = vsub.f32 %v755, %v766
    %v768 = vsub.f32 %v756, %v766
    %v769 = vand.u32 2147483647, %v767
    %v770 = vand.u32 2147483647, %v768
    %v771 = vsub.f32 %v711, %v769
    %v772 = vsub.f32 %v712, %v770
    %s773 = sld [smem:[#allocation16 + $0x106]]
    %v774 = vstv %s773
    %v775 = vsub.f32 %v755, %v774
    %v776 = vsub.f32 %v756, %v774
    %v777 = vand.u32 2147483647, %v775
    %v778 = vand.u32 2147483647, %v776
    %v779 = vsub.f32 %v719, %v777
    %v780 = vsub.f32 %v720, %v778
    %s781 = sld [smem:[#allocation16 + $0x7]]
    %v782 = vstv %s781
    %v783 = vsub.f32 %v722, %v782
    %v784 = vsub.f32 %v724, %v782
    %v785 = vsub.f32 %v726, %v782
    %v786 = vand.u32 2147483647, %v783
    %v787 = vand.u32 2147483647, %v784
    %v788 = vand.u32 2147483647, %v785
    %v792 = vrot.slane %v786, 1
    %v793 = vrot.slane %v787, 1
    %v794 = vsel %vm380, %v792, %v793
    %v795 = vrot.slane %v788, 1
    %v796 = vsel %vm380, %v793, %v795
    %v799 = vsub.f32 %v763, %v794
    %v800 = vsub.f32 %v764, %v796
    %s801 = sld [smem:[#allocation16 + $0x87]]
    %v802 = vstv %s801
    %v803 = vsub.f32 %v722, %v802
    %v804 = vsub.f32 %v724, %v802
    %v805 = vsub.f32 %v726, %v802
    %v806 = vand.u32 2147483647, %v803
    %v807 = vand.u32 2147483647, %v804
    %v808 = vand.u32 2147483647, %v805
    %v812 = vrot.slane %v806, 1
    %v813 = vrot.slane %v807, 1
    %v814 = vsel %vm380, %v812, %v813
    %v815 = vrot.slane %v808, 1
    %v816 = vsel %vm380, %v813, %v815
    %v819 = vsub.f32 %v771, %v814
    %v820 = vsub.f32 %v772, %v816
    %s821 = sld [smem:[#allocation16 + $0x107]]
    %v822 = vstv %s821
    %v823 = vsub.f32 %v722, %v822
    %v824 = vsub.f32 %v724, %v822
    %v825 = vsub.f32 %v726, %v822
    %v826 = vand.u32 2147483647, %v823
    %v827 = vand.u32 2147483647, %v824
    %v828 = vand.u32 2147483647, %v825
    %v832 = vrot.slane %v826, 1
    %v833 = vrot.slane %v827, 1
    %v834 = vsel %vm380, %v832, %v833
    %v835 = vrot.slane %v828, 1
    %v836 = vsel %vm380, %v833, %v835
    %v839 = vsub.f32 %v779, %v834
    %v840 = vsub.f32 %v780, %v836
    %841 = vrot.lane.b32.xlu0 %v738, 127
    %v842 = vpop.permute.xlu0 %841
    %843 = vrot.lane.b32.xlu0 %v742, 127
    %v844 = vpop.permute.xlu0 %843
    %v847 = vsel %vm234, 0.0, %v842
    %v848 = vsel %vm234, 0.0, %v844
    %s849 = sld [smem:[#allocation16 + $0x8]]
    %v850 = vstv %s849
    %v851 = vsub.f32 %v847, %v850
    %v852 = vsub.f32 %v848, %v850
    %v853 = vand.u32 2147483647, %v851
    %v854 = vand.u32 2147483647, %v852
    %v855 = vsub.f32 %v799, %v853
    %v856 = vsub.f32 %v800, %v854
    %s857 = sld [smem:[#allocation16 + $0x88]]
    %v858 = vstv %s857
    %v859 = vsub.f32 %v847, %v858
    %v860 = vsub.f32 %v848, %v858
    %v861 = vand.u32 2147483647, %v859
    %v862 = vand.u32 2147483647, %v860
    %v863 = vsub.f32 %v819, %v861
    %v864 = vsub.f32 %v820, %v862
    %s865 = sld [smem:[#allocation16 + $0x108]]
    %v866 = vstv %s865
    %v867 = vsub.f32 %v847, %v866
    %v868 = vsub.f32 %v848, %v866
    %v869 = vand.u32 2147483647, %v867
    %v870 = vand.u32 2147483647, %v868
    %v871 = vsub.f32 %v839, %v869
    %v872 = vsub.f32 %v840, %v870
    %s873 = sld [smem:[#allocation17]]
    %v874 = vstv %s873
    %v875 = vmul.f32 %v855, %v874
    %v876 = vmul.f32 %v856, %v874
    %s877 = sld [smem:[#allocation19]]
    %v878 = vstv %s877
    %v879 = vadd.f32 %v875, %v878
    %v880 = vadd.f32 %v876, %v878
    %v881 = vmax.f32 %v879, 0.0
    %v882 = vmax.f32 %v880, 0.0
    %885 = vrot.lane.b32.xlu0 %v881, 32
    %v886 = vpop.permute.xlu0 %885
    %887 = vrot.lane.b32.xlu0 %v882, 32
    %v888 = vpop.permute.xlu0 %887
    %vm891 = vcmask 523520
    %892 = vst.msk [vmem:[#allocation2 + $0x20] sm:$0xff] %vm891, %v886
    %893 = vst.msk [vmem:[#allocation2 + $0x38] sm:$0xff] %vm891, %v888
    %s894 = sld [smem:[#allocation17 + $0x1]]
    %v895 = vstv %s894
    %v896 = vmul.f32 %v863, %v895
    %v897 = vmul.f32 %v864, %v895
    %s898 = sld [smem:[#allocation19 + $0x1]]
    %v899 = vstv %s898
    %v900 = vadd.f32 %v896, %v899
    %v901 = vadd.f32 %v897, %v899
    %v902 = vmax.f32 %v900, 0.0
    %v903 = vmax.f32 %v901, 0.0
    %906 = vrot.lane.b32.xlu0 %v902, 64
    %v907 = vpop.permute.xlu0 %906
    %908 = vrot.lane.b32.xlu0 %v903, 64
    %v909 = vpop.permute.xlu0 %908
    %vm912 = vcmask 785920
    %913 = vst.msk [vmem:[#allocation2 + $0x20] sm:$0xff] %vm912, %v907
    %914 = vst.msk [vmem:[#allocation2 + $0x38] sm:$0xff] %vm912, %v909
    %s915 = sld [smem:[#allocation17 + $0x2]]
    %v916 = vstv %s915
    %v917 = vmul.f32 %v871, %v916
    %v918 = vmul.f32 %v872, %v916
    %s919 = sld [smem:[#allocation19 + $0x2]]
    %v920 = vstv %s919
    %v921 = vadd.f32 %v917, %v920
    %v922 = vadd.f32 %v918, %v920
    %v923 = vmax.f32 %v921, 0.0
    %v924 = vmax.f32 %v922, 0.0
    %927 = vrot.lane.b32.xlu0 %v923, 96
    %v928 = vpop.permute.xlu0 %927
    %929 = vrot.lane.b32.xlu0 %v924, 96
    %v930 = vpop.permute.xlu0 %929
    %vm933 = vcmask 1048320
    %934 = vst.msk [vmem:[#allocation2 + $0x20] sm:$0xff] %vm933, %v928
    %935 = vst.msk [vmem:[#allocation2 + $0x38] sm:$0xff] %vm933, %v930
    %v936 = vld [vmem:[#allocation2] sm:$0x80]
    %v937 = vld [vmem:[#allocation2 + $0x8] sm:$0x80]
    %v938 = vld [vmem:[#allocation2 + $0x18] sm:$0xff]
    %v939 = vld [vmem:[#allocation2 + $0x20] sm:$0xff]
    %v940 = vld [vmem:[#allocation2 + $0x30] sm:$0x7f]
    %v941 = vld [vmem:[#allocation2 + $0x38] sm:$0x7f]
    %v948 = vrot.slane %v936, 7
    %v949 = vrot.slane %v938, 7
    %v950 = vsel %vm247, %v948, %v949
    %v951 = vrot.slane %v937, 7
    %v952 = vrot.slane %v939, 7
    %v953 = vsel %vm247, %v951, %v952
    %v954 = vrot.slane %v940, 7
    %v955 = vsel %vm247, %v949, %v954
    %v956 = vrot.slane %v941, 7
    %v957 = vsel %vm247, %v952, %v956
    %958 = vrot.lane.b32.xlu0 %v950, 1
    %v959 = vpop.permute.xlu0 %958
    %960 = vrot.lane.b32.xlu0 %v953, 1
    %v961 = vpop.permute.xlu0 %960
    %962 = vrot.lane.b32.xlu0 %v955, 1
    %v963 = vpop.permute.xlu0 %962
    %964 = vrot.lane.b32.xlu0 %v957, 1
    %v965 = vpop.permute.xlu0 %964
    %v966 = vsel %vm266, %v959, %v961
    %v967 = vsel %vm266, %v963, %v965
    %v970 = vsel %vm233, 0.0, %v966
    %v971 = vsel %vm233, 0.0, %v967
    %v972 = vld [vmem:[%s4] sm:$0x1]
    %v973 = vlaneseq
    %v974 = vshrl.u32 %v973, 7
    %v975 = vsub.s32 0, %v974
    %v976 = vrot.slane %v972, %v975
    %v977 = vmul.f32 %v970, %v976
    %v978 = vmul.f32 %v971, %v976
    %v979 = vadd.f32 %v977, 0.0
    %v980 = vadd.f32 %v978, 0.0
    %v981 = vld [vmem:[%s4 + $0x1] sm:$0x1]
    %v982 = vlaneseq
    %v983 = vshrl.u32 %v982, 7
    %v984 = vsub.s32 0, %v983
    %v985 = vrot.slane %v981, %v984
    %v986 = vmul.f32 %v937, %v985
    %v987 = vmul.f32 %v939, %v985
    %v988 = vmul.f32 %v941, %v985
    %v992 = vrot.slane %v986, 7
    %v993 = vrot.slane %v987, 7
    %v994 = vsel %vm247, %v992, %v993
    %v995 = vrot.slane %v988, 7
    %v996 = vsel %vm247, %v993, %v995
    %v999 = vadd.f32 %v979, %v994
    %v1000 = vadd.f32 %v980, %v996
    %v1001 = vld [vmem:[#allocation2 + $0x10] sm:$0x80]
    %v1002 = vld [vmem:[#allocation2 + $0x28] sm:$0xff]
    %v1003 = vld [vmem:[#allocation2 + $0x40] sm:$0x7f]
    %v1007 = vrot.slane %v1001, 7
    %v1008 = vrot.slane %v1002, 7
    %v1009 = vsel %vm247, %v1007, %v1008
    %v1010 = vrot.slane %v1003, 7
    %v1011 = vsel %vm247, %v1008, %v1010
    %1012 = vrot.lane.b32.xlu0 %v953, 127
    %v1013 = vpop.permute.xlu0 %1012
    %1014 = vrot.lane.b32.xlu0 %v1009, 127
    %v1015 = vpop.permute.xlu0 %1014
    %1016 = vrot.lane.b32.xlu0 %v957, 127
    %v1017 = vpop.permute.xlu0 %1016
    %1018 = vrot.lane.b32.xlu0 %v1011, 127
    %v1019 = vpop.permute.xlu0 %1018
    %vm1020 = vcmask 1039360
    %v1021 = vsel %vm1020, %v1013, %v1015
    %v1022 = vsel %vm1020, %v1017, %v1019
    %v1025 = vsel %vm234, 0.0, %v1021
    %v1026 = vsel %vm234, 0.0, %v1022
    %v1027 = vld [vmem:[%s4 + $0x2] sm:$0x1]
    %v1028 = vlaneseq
    %v1029 = vshrl.u32 %v1028, 7
    %v1030 = vsub.s32 0, %v1029
    %v1031 = vrot.slane %v1027, %v1030
    %v1032 = vmul.f32 %v1025, %v1031
    %v1033 = vmul.f32 %v1026, %v1031
    %v1034 = vadd.f32 %v999, %v1032
    %v1035 = vadd.f32 %v1000, %v1033
    %v1036 = vld [vmem:[#allocation2 + $0x30] sm:$0xff]
    %v1037 = vld [vmem:[#allocation2 + $0x38] sm:$0xff]
    %1040 = vrot.lane.b32.xlu0 %v938, 1
    %v1041 = vpop.permute.xlu0 %1040
    %1042 = vrot.lane.b32.xlu0 %v939, 1
    %v1043 = vpop.permute.xlu0 %1042
    %1044 = vrot.lane.b32.xlu0 %v1036, 1
    %v1045 = vpop.permute.xlu0 %1044
    %1046 = vrot.lane.b32.xlu0 %v1037, 1
    %v1047 = vpop.permute.xlu0 %1046
    %v1048 = vsel %vm266, %v1041, %v1043
    %v1049 = vsel %vm266, %v1045, %v1047
    %v1052 = vsel %vm233, 0.0, %v1048
    %v1053 = vsel %vm233, 0.0, %v1049
    %v1054 = vld [vmem:[%s4 + $0x3] sm:$0x1]
    %v1055 = vlaneseq
    %v1056 = vshrl.u32 %v1055, 7
    %v1057 = vsub.s32 0, %v1056
    %v1058 = vrot.slane %v1054, %v1057
    %v1059 = vmul.f32 %v1052, %v1058
    %v1060 = vmul.f32 %v1053, %v1058
    %v1061 = vadd.f32 %v1034, %v1059
    %v1062 = vadd.f32 %v1035, %v1060
    %v1063 = vld [vmem:[%s4 + $0x4] sm:$0x1]
    %v1064 = vlaneseq
    %v1065 = vshrl.u32 %v1064, 7
    %v1066 = vsub.s32 0, %v1065
    %v1067 = vrot.slane %v1063, %v1066
    %v1068 = vmul.f32 %v939, %v1067
    %v1069 = vmul.f32 %v1037, %v1067
    %v1070 = vadd.f32 %v1061, %v1068
    %v1071 = vadd.f32 %v1062, %v1069
    %v1072 = vld [vmem:[#allocation2 + $0x40] sm:$0xff]
    %1074 = vrot.lane.b32.xlu0 %v939, 127
    %v1075 = vpop.permute.xlu0 %1074
    %1076 = vrot.lane.b32.xlu0 %v1002, 127
    %v1077 = vpop.permute.xlu0 %1076
    %1078 = vrot.lane.b32.xlu0 %v1037, 127
    %v1079 = vpop.permute.xlu0 %1078
    %1080 = vrot.lane.b32.xlu0 %v1072, 127
    %v1081 = vpop.permute.xlu0 %1080
    %v1082 = vsel %vm1020, %v1075, %v1077
    %v1083 = vsel %vm1020, %v1079, %v1081
    %v1086 = vsel %vm234, 0.0, %v1082
    %v1087 = vsel %vm234, 0.0, %v1083
    %v1088 = vld [vmem:[%s4 + $0x5] sm:$0x1]
    %v1089 = vlaneseq
    %v1090 = vshrl.u32 %v1089, 7
    %v1091 = vsub.s32 0, %v1090
    %v1092 = vrot.slane %v1088, %v1091
    %v1093 = vmul.f32 %v1086, %v1092
    %v1094 = vmul.f32 %v1087, %v1092
    %v1095 = vadd.f32 %v1070, %v1093
    %v1096 = vadd.f32 %v1071, %v1094
    %v1097 = vld [vmem:[#allocation2 + $0x18] sm:$0xfe]
    %v1098 = vld [vmem:[#allocation2 + $0x20] sm:$0xfe]
    %v1099 = vld [vmem:[#allocation2 + $0x48] sm:$0x1]
    %v1100 = vld [vmem:[#allocation2 + $0x50] sm:$0x1]
    %v1105 = vrot.slane %v1097, 1
    %v1106 = vrot.slane %v1036, 1
    %v1107 = vsel %vm380, %v1105, %v1106
    %v1108 = vrot.slane %v1098, 1
    %v1109 = vrot.slane %v1037, 1
    %v1110 = vsel %vm380, %v1108, %v1109
    %v1111 = vrot.slane %v1099, 1
    %v1112 = vsel %vm380, %v1106, %v1111
    %v1113 = vrot.slane %v1100, 1
    %v1114 = vsel %vm380, %v1109, %v1113
    %1115 = vrot.lane.b32.xlu0 %v1107, 1
    %v1116 = vpop.permute.xlu0 %1115
    %1117 = vrot.lane.b32.xlu0 %v1110, 1
    %v1118 = vpop.permute.xlu0 %1117
    %1119 = vrot.lane.b32.xlu0 %v1112, 1
    %v1120 = vpop.permute.xlu0 %1119
    %1121 = vrot.lane.b32.xlu0 %v1114, 1
    %v1122 = vpop.permute.xlu0 %1121
    %v1123 = vsel %vm266, %v1116, %v1118
    %v1124 = vsel %vm266, %v1120, %v1122
    %v1127 = vsel %vm233, 0.0, %v1123
    %v1128 = vsel %vm233, 0.0, %v1124
    %v1129 = vld [vmem:[%s4 + $0x6] sm:$0x1]
    %v1130 = vlaneseq
    %v1131 = vshrl.u32 %v1130, 7
    %v1132 = vsub.s32 0, %v1131
    %v1133 = vrot.slane %v1129, %v1132
    %v1134 = vmul.f32 %v1127, %v1133
    %v1135 = vmul.f32 %v1128, %v1133
    %v1136 = vadd.f32 %v1095, %v1134
    %v1137 = vadd.f32 %v1096, %v1135
    %v1138 = vld [vmem:[%s4 + $0x7] sm:$0x1]
    %v1139 = vlaneseq
    %v1140 = vshrl.u32 %v1139, 7
    %v1141 = vsub.s32 0, %v1140
    %v1142 = vrot.slane %v1138, %v1141
    %v1143 = vmul.f32 %v1098, %v1142
    %v1144 = vmul.f32 %v1037, %v1142
    %v1145 = vmul.f32 %v1100, %v1142
    %v1149 = vrot.slane %v1143, 1
    %v1150 = vrot.slane %v1144, 1
    %v1151 = vsel %vm380, %v1149, %v1150
    %v1152 = vrot.slane %v1145, 1
    %v1153 = vsel %vm380, %v1150, %v1152
    %v1156 = vadd.f32 %v1136, %v1151
    %v1157 = vadd.f32 %v1137, %v1153
    %v1158 = vld [vmem:[#allocation2 + $0x20] sm:$0xfe]
    %v1159 = vld [vmem:[#allocation2 + $0x28] sm:$0xfe]
    %v1160 = vld [vmem:[#allocation2 + $0x38] sm:$0xff]
    %v1161 = vld [vmem:[#allocation2 + $0x40] sm:$0xff]
    %v1162 = vld [vmem:[#allocation2 + $0x50] sm:$0x1]
    %v1163 = vld [vmem:[#allocation2 + $0x58] sm:$0x1]
    %v1170 = vrot.slane %v1158, 1
    %v1171 = vrot.slane %v1160, 1
    %v1172 = vsel %vm380, %v1170, %v1171
    %v1173 = vrot.slane %v1159, 1
    %v1174 = vrot.slane %v1161, 1
    %v1175 = vsel %vm380, %v1173, %v1174
    %v1176 = vrot.slane %v1162, 1
    %v1177 = vsel %vm380, %v1171, %v1176
    %v1178 = vrot.slane %v1163, 1
    %v1179 = vsel %vm380, %v1174, %v1178
    %1180 = vrot.lane.b32.xlu0 %v1172, 127
    %v1181 = vpop.permute.xlu0 %1180
    %1182 = vrot.lane.b32.xlu0 %v1175, 127
    %v1183 = vpop.permute.xlu0 %1182
    %1184 = vrot.lane.b32.xlu0 %v1177, 127
    %v1185 = vpop.permute.xlu0 %1184
    %1186 = vrot.lane.b32.xlu0 %v1179, 127
    %v1187 = vpop.permute.xlu0 %1186
    %v1188 = vsel %vm1020, %v1181, %v1183
    %v1189 = vsel %vm1020, %v1185, %v1187
    %v1192 = vsel %vm234, 0.0, %v1188
    %v1193 = vsel %vm234, 0.0, %v1189
    %v1194 = vld [vmem:[%s4 + $0x8] sm:$0x1]
    %v1195 = vlaneseq
    %v1196 = vshrl.u32 %v1195, 7
    %v1197 = vsub.s32 0, %v1196
    %v1198 = vrot.slane %v1194, %v1197
    %v1199 = vmul.f32 %v1192, %v1198
    %v1200 = vmul.f32 %v1193, %v1198
    %v1201 = vadd.f32 %v1156, %v1199
    %v1202 = vadd.f32 %v1157, %v1200
    %v1203 = vld [vmem:[#allocation12] sm:$0x1]
    %v1205 = vlaneseq
    %v1206 = vshrl.u32 %v1205, 7
    %v1207 = vsub.s32 0, %v1206
    %v1208 = vrot.slane %v1203, %v1207
    %v1210 = vmul.f32 %v1201, %v1208
    %v1211 = vmul.f32 %v1202, %v1208
    %v1212 = vld [vmem:[#allocation13] sm:$0x1]
    %v1214 = vlaneseq
    %v1215 = vshrl.u32 %v1214, 7
    %v1216 = vsub.s32 0, %v1215
    %v1217 = vrot.slane %v1212, %v1216
    %v1219 = vadd.f32 %v1210, %v1217
    %v1220 = vadd.f32 %v1211, %v1217
    %v1221 = vadd.f32 %v1219, %v158
    %v1222 = vadd.f32 %v1220, %v159
    %v1223 = vmax.f32 %v1221, 0.0
    %v1224 = vmax.f32 %v1222, 0.0
    %1225 = vst [vmem:[#allocation20] sm:$0xff] %v1223
    %1226 = vst [vmem:[#allocation20 + $0x8] sm:$0xff] %v1224
    // Predicated region
    $region86: #{tpu_custom_call.1} parent=1 // pred_check
      _
    $region87: #{tpu_custom_call.1} parent=1 // pred_check_branch
      %1228 = sbr.rel (0) target = $region89
    $region88: #{tpu_custom_call.1} parent=1 // pred_region
      %s1230 = ssub.s32 256, 256
      %1231 = vsyncadd [#allocation7], %s1230
      %s1232 = sshll.u32 [#allocation20], 4
      %s1233 = int_to_ptr.vmem [resolvable:$true] %s1232
      %1238 = dma.vmem_to_hbm [thread:$0]  %s1233, 256, %s13, [#allocation7], 128, 128, 8
    $region89: #{tpu_custom_call.1} parent=1 // pred_fallthru
      _
    // Predicated region
    $region90: #{tpu_custom_call.1} parent=1 // pred_check
      _
    $region91: #{tpu_custom_call.1} parent=1 // pred_check_branch
      %1240 = sbr.rel (0) target = $region93
    $region92: #{tpu_custom_call.1} parent=1 // pred_region
      %1241 = dma.done [#allocation7], 256
    $region93: #{tpu_custom_call.1} parent=1 // pred_fallthru
      _
    %1242 = vsyncpa [#allocation6], 1
    %1243 = vsyncpa [#allocation11], 1
    %1244 = vsyncpa [#allocation14], 1
    %1245 = vsyncpa [#allocation7], 1
    %1246 = vsyncpa [#allocation8], 1
    %1247 = vsyncpa [#allocation9], 1
    %1248 = vsyncpa [#allocation18], 1

</llo_original>
